<compile_context>
chip_gen: v5e
topology: v5e:2x2
jax: 0.10.0
libtpu: 0.0.40
codegen_flags: <defaults>
</compile_context>

<pallas_src>
import jax
import jax.numpy as jnp
from jax.experimental import pallas as pl
from jax.experimental.pallas import tpu as pltpu


def _round_up(n, m):
    return ((n + m - 1) // m) * m


def _device_tiles():
    """Per-generation (tile, vmem_limit_bytes, min_row_tiles)."""
    try:
        kind = jax.devices()[0].device_kind.lower()
    except Exception:
        kind = ""
    if "v7" in kind or "7x" in kind:
        # 64 MiB physical VMEM, 2 TensorCores -> want >= 2 row tiles to shard
        # the "parallel" axis across both cores.
        return 2048, 48 << 20, 2
    return 2048, 64 << 20, 1


# ---------------------------------------------------------------------------
# Fused kernel: mlp1 (recomputed per block) + mean aggregation + lin_l/lin_r.
#   acc    += A_cnt[i-blk, k-blk] @ mlp(x[k-blk])        (accumulated over k)
#   out[i]  = (acc * inv_deg[i]) @ Wl + mlp(x[i-blk]) @ Wr + b_l    (last k)
# ---------------------------------------------------------------------------
def _mlp(x, w1, b1, w2, b2):
    t = jnp.dot(x, w1, preferred_element_type=jnp.float32) + b1
    t = jnp.maximum(t, 0.0)
    return jnp.dot(t, w2, preferred_element_type=jnp.float32) + b2


def _net7_kernel(adj_ref, xk_ref, xi_ref, invdeg_ref,
                 w1_ref, b1_ref, w2_ref, b2_ref, wl_ref, wr_ref, bl_ref,
                 out_ref, acc_ref):
    k = pl.program_id(1)

    @pl.when(k == 0)
    def _():
        acc_ref[...] = jnp.zeros_like(acc_ref)

    # Recompute h for the K block of source rows (tiny; hides under the
    # adjacency DMA) and accumulate the message sum on the MXU's native
    # bf16 x bf16 -> f32 path. The int8 -> bf16 convert happens in-register;
    # no f32 copy of the (T, T) adjacency tile is materialized in VMEM.
    hk = _mlp(xk_ref[...], w1_ref[...], b1_ref[...], w2_ref[...], b2_ref[...])
    acc_ref[...] += jnp.dot(adj_ref[...].astype(jnp.bfloat16),
                            hk.astype(jnp.bfloat16),
                            preferred_element_type=jnp.float32)

    @pl.when(k == pl.num_programs(1) - 1)
    def _():
        # h for the destination rows (lin_r path), computed once per row tile.
        hi = _mlp(xi_ref[...], w1_ref[...], b1_ref[...], w2_ref[...], b2_ref[...])
        agg = acc_ref[...] * invdeg_ref[...]                    # mean (f32 scale)
        out_ref[...] = (
            jnp.dot(agg, wl_ref[...], preferred_element_type=jnp.float32)
            + jnp.dot(hi, wr_ref[...], preferred_element_type=jnp.float32)
            + bl_ref[...])


def net7_forward(x, edge_index, params, *, tile=None):
    """x: [N, 16] float32, edge_index: [2, E] int32 (row 0 = src, row 1 = dst).

    `tile` (multiple of 128) overrides the per-generation default tile size.
    """
    N = x.shape[0]
    auto_tile, vmem_limit, min_row_tiles = _device_tiles()
    if tile is None:
        tile = auto_tile
    T = max(128, (min(tile, _round_up(N, 128)) // 128) * 128)
    # v7x megacore: make sure the "parallel" row axis has >= min_row_tiles tiles.
    while min_row_tiles > 1 and _round_up(N, T) // T < min_row_tiles and T > 128:
        T = max(128, ((T // 2) // 128) * 128)
    Np = _round_up(N, T)

    # ---- wrapper glue: pad rows, dense integer adjacency counts and 1/deg ----
    # Padded rows produce nonzero mlp(0) activations, but no edge references a
    # padded node, so their adjacency rows/columns are all zero and they never
    # contribute to agg; padded output rows are sliced off at the end.
    xp = jnp.zeros((Np, 16), jnp.float32).at[:N].set(x)
    src, dst = edge_index[0], edge_index[1]
    a_cnt = jnp.zeros((Np, Np), jnp.float32).at[dst, src].add(1.0)
    deg = a_cnt.sum(axis=1, keepdims=True)
    inv_deg = 1.0 / jnp.maximum(deg, 1.0)    # rows w/o in-edges -> agg stays 0

    # int8 adjacency is exact iff every (dst, src) duplicate-edge multiplicity
    # is <= 127; guard when the wrapper runs eagerly (skip silently under jit).
    try:
        max_mult = int(jnp.max(a_cnt))
    except jax.errors.ConcretizationTypeError:
        max_mult = None
    if max_mult is not None and max_mult > 127:
        raise ValueError(
            f"int8 adjacency overflow: duplicate-edge multiplicity {max_mult} > 127")
    a_i8 = a_cnt.astype(jnp.int8)
    # TODO(synk): for large sparse graphs replace the O(N^2) dense adjacency with
    # a CSR scalar-prefetch (PrefetchScalarGridSpec) row-gather + segment-mean.

    w1, b1, w2, b2, wl, bl, wr = (params[k] for k in
                                  ("w1", "b1", "w2", "b2", "wl", "bl", "wr"))

    nt = Np // T
    out = pl.pallas_call(
        _net7_kernel,
        out_shape=jax.ShapeDtypeStruct((Np, 32), jnp.float32),
        grid=(nt, nt),
        in_specs=[
            pl.BlockSpec((T, T), lambda i, k: (i, k)),      # int8 adjacency counts
            pl.BlockSpec((T, 16), lambda i, k: (k, 0)),     # x rows for K block
            pl.BlockSpec((T, 16), lambda i, k: (i, 0)),     # x rows for I block
            pl.BlockSpec((T, 1), lambda i, k: (i, 0)),      # 1/deg
            pl.BlockSpec((16, 16), lambda i, k: (0, 0)),    # w1
            pl.BlockSpec((1, 16), lambda i, k: (0, 0)),     # b1
            pl.BlockSpec((16, 16), lambda i, k: (0, 0)),    # w2
            pl.BlockSpec((1, 16), lambda i, k: (0, 0)),     # b2
            pl.BlockSpec((16, 32), lambda i, k: (0, 0)),    # Wl (lin_l weight)
            pl.BlockSpec((16, 32), lambda i, k: (0, 0)),    # Wr (lin_r weight)
            pl.BlockSpec((1, 32), lambda i, k: (0, 0)),     # lin_l bias
        ],
        out_specs=pl.BlockSpec((T, 32), lambda i, k: (i, 0)),
        scratch_shapes=[pltpu.VMEM((T, 16), jnp.float32)],
        compiler_params=pltpu.CompilerParams(
            dimension_semantics=("parallel", "arbitrary"),
            vmem_limit_bytes=vmem_limit),
    )(a_i8, xp, xp, inv_deg, w1, b1, w2, b2, wl, wr, bl)

    return out[:N]


def init_params(key):
    """Synthetic parameters matching Net7's shapes, stored transposed [in, out].

    PyTorch shapes: mlp1.0: W[16,16], b[16]; mlp1.2: W[16,16], b[16];
                    conv1.lin_l: W[32,16], b[32]; conv1.lin_r: W[32,16] (no bias).
    """
    ks = jax.random.split(key, 7)
    s = 0.25
    return {
        "w1": jax.random.normal(ks[0], (16, 16), jnp.float32) * s,
        "b1": jax.random.normal(ks[1], (1, 16), jnp.float32) * s,
        "w2": jax.random.normal(ks[2], (16, 16), jnp.float32) * s,
        "b2": jax.random.normal(ks[3], (1, 16), jnp.float32) * s,
        "wl": jax.random.normal(ks[4], (16, 32), jnp.float32) * s,
        "bl": jax.random.normal(ks[5], (1, 32), jnp.float32) * s,
        "wr": jax.random.normal(ks[6], (16, 32), jnp.float32) * s,
    }


def net7_reference(x, edge_index, params):
    """Pure-JAX reference (mirrors PyTorch/PyG semantics, all-f32)."""
    h = jnp.maximum(x @ params["w1"] + params["b1"], 0.0)
    h = h @ params["w2"] + params["b2"]
    N = x.shape[0]
    src, dst = edge_index[0], edge_index[1]
    msg_sum = jnp.zeros((N, h.shape[1]), jnp.float32).at[dst].add(h[src])
    deg = jnp.zeros((N, 1), jnp.float32).at[dst].add(1.0)
    agg = msg_sum / jnp.maximum(deg, 1.0)
    return agg @ params["wl"] + params["bl"] + h @ params["wr"]


if __name__ == "__main__":
    key = jax.random.PRNGKey(0)
    k_x, k_e, k_p = jax.random.split(key, 3)

    N, E = 512, 2048
    x = jax.random.normal(k_x, (N, 16), jnp.float32)
    edge_index = jax.random.randint(k_e, (2, E), 0, N, dtype=jnp.int32)
    params = init_params(k_p)

    # tile=128 keeps the test small while exercising the (row, K) grid, the int8
    # adjacency path, the fused in-kernel MLP and the pl.when init/finalize.
    out = net7_forward(x, edge_index, params, tile=128)
    out = jax.block_until_ready(out)

    ref = net7_reference(x, edge_index, params)
    assert out.shape == (N, 32)
    # Tolerance loosened vs. the all-f32 reference: h is fed to the MXU in bf16.
    assert jnp.allclose(out, ref, atol=5e-2, rtol=5e-2), "mismatch vs reference"

    print("KERNEL_OK")
</pallas_src>

<mosaic_0001>
module attributes {stable_mosaic.version = 11 : i64} {
  func.func @_net7_kernel(%arg0: i32, %arg1: i32, %arg2: memref<128x128xi8, #tpu.memory_space<vmem>>, %arg3: memref<128x16xf32, #tpu.memory_space<vmem>>, %arg4: memref<128x16xf32, #tpu.memory_space<vmem>>, %arg5: memref<128x1xf32, #tpu.memory_space<vmem>>, %arg6: memref<16x16xf32, #tpu.memory_space<vmem>>, %arg7: memref<1x16xf32, #tpu.memory_space<vmem>>, %arg8: memref<16x16xf32, #tpu.memory_space<vmem>>, %arg9: memref<1x16xf32, #tpu.memory_space<vmem>>, %arg10: memref<16x32xf32, #tpu.memory_space<vmem>>, %arg11: memref<16x32xf32, #tpu.memory_space<vmem>>, %arg12: memref<1x32xf32, #tpu.memory_space<vmem>>, %arg13: memref<128x32xf32, #tpu.memory_space<vmem>>, %arg14: memref<128x16xf32, #tpu.memory_space<vmem>>) attributes {dimension_semantics = [#tpu.dimension_semantics<parallel>, #tpu.dimension_semantics<arbitrary>], iteration_bounds = array<i64: 4, 4>, scalar_prefetch = 0 : i64, scratch_operands = 1 : i64, tpu.core_type = #tpu.core_type<tc>, window_params = [{transform_indices = @transform_0, window_bounds = array<i64: 128, 128>}, {transform_indices = @transform_1, window_bounds = array<i64: 128, 16>}, {transform_indices = @transform_2, window_bounds = array<i64: 128, 16>}, {transform_indices = @transform_3, window_bounds = array<i64: 128, 1>}, {pipeline_mode = #tpu.pipeline_mode<synchronous>, transform_indices = @transform_4, window_bounds = array<i64: 16, 16>}, {pipeline_mode = #tpu.pipeline_mode<synchronous>, transform_indices = @transform_5, window_bounds = array<i64: 1, 16>}, {pipeline_mode = #tpu.pipeline_mode<synchronous>, transform_indices = @transform_6, window_bounds = array<i64: 16, 16>}, {pipeline_mode = #tpu.pipeline_mode<synchronous>, transform_indices = @transform_7, window_bounds = array<i64: 1, 16>}, {pipeline_mode = #tpu.pipeline_mode<synchronous>, transform_indices = @transform_8, window_bounds = array<i64: 16, 32>}, {pipeline_mode = #tpu.pipeline_mode<synchronous>, transform_indices = @transform_9, window_bounds = array<i64: 16, 32>}, {pipeline_mode = #tpu.pipeline_mode<synchronous>, transform_indices = @transform_10, window_bounds = array<i64: 1, 32>}, {transform_indices = @transform_11, window_bounds = array<i64: 128, 32>}]} {
    %c0_i32 = arith.constant 0 : i32
    %0 = arith.cmpi eq, %arg1, %c0_i32 : i32
    %1 = arith.extui %0 : i1 to i32
    %c0_i32_0 = arith.constant 0 : i32
    %2 = arith.cmpi ne, %1, %c0_i32_0 : i32
    scf.if %2 {
      %cst_20 = arith.constant 0.000000e+00 : f32
      %26 = vector.broadcast %cst_20 : f32 to vector<128x16xf32>
      %c0_21 = arith.constant 0 : index
      %c0_22 = arith.constant 0 : index
      %27 = vector.load %arg14[%c0_21, %c0_22] : memref<128x16xf32, #tpu.memory_space<vmem>>, vector<128x16xf32>
      tpu.vector_store %arg14[%c0_21, %c0_22], %26 {strides = array<i32>} : memref<128x16xf32, #tpu.memory_space<vmem>>, vector<128x16xf32>,
    } else {
    }
    %c0 = arith.constant 0 : index
    %c0_1 = arith.constant 0 : index
    %3 = vector.load %arg3[%c0, %c0_1] : memref<128x16xf32, #tpu.memory_space<vmem>>, vector<128x16xf32>
    %c0_2 = arith.constant 0 : index
    %c0_3 = arith.constant 0 : index
    %4 = vector.load %arg6[%c0_2, %c0_3] : memref<16x16xf32, #tpu.memory_space<vmem>>, vector<16x16xf32>
    %c0_4 = arith.constant 0 : index
    %c0_5 = arith.constant 0 : index
    %5 = vector.load %arg7[%c0_4, %c0_5] : memref<1x16xf32, #tpu.memory_space<vmem>>, vector<1x16xf32>
    %c0_6 = arith.constant 0 : index
    %c0_7 = arith.constant 0 : index
    %6 = vector.load %arg8[%c0_6, %c0_7] : memref<16x16xf32, #tpu.memory_space<vmem>>, vector<16x16xf32>
    %c0_8 = arith.constant 0 : index
    %c0_9 = arith.constant 0 : index
    %7 = vector.load %arg9[%c0_8, %c0_9] : memref<1x16xf32, #tpu.memory_space<vmem>>, vector<1x16xf32>
    %cst = arith.constant dense<0.000000e+00> : vector<128x16xf32>
    %8 = tpu.matmul %3, %4, %cst {dimension_numbers = #tpu.dot_dimension_numbers<[1], [0], [0], [1], [0, 0, 1, 1], [], []>} : vector<128x16xf32>, vector<16x16xf32>, vector<128x16xf32> -> vector<128x16xf32>
    %9 = vector.broadcast %5 : vector<1x16xf32> to vector<128x16xf32>
    %10 = arith.addf %8, %9 : vector<128x16xf32>
    %cst_10 = arith.constant 0.000000e+00 : f32
    %11 = vector.broadcast %cst_10 : f32 to vector<128x16xf32>
    %12 = arith.maximumf %10, %11 : vector<128x16xf32>
    %cst_11 = arith.constant dense<0.000000e+00> : vector<128x16xf32>
    %13 = tpu.matmul %12, %6, %cst_11 {dimension_numbers = #tpu.dot_dimension_numbers<[1], [0], [0], [1], [0, 0, 1, 1], [], []>} : vector<128x16xf32>, vector<16x16xf32>, vector<128x16xf32> -> vector<128x16xf32>
    %14 = vector.broadcast %7 : vector<1x16xf32> to vector<128x16xf32>
    %15 = arith.addf %13, %14 : vector<128x16xf32>
    %c0_12 = arith.constant 0 : index
    %c0_13 = arith.constant 0 : index
    %16 = vector.load %arg14[%c0_12, %c0_13] : memref<128x16xf32, #tpu.memory_space<vmem>>, vector<128x16xf32>
    %c0_14 = arith.constant 0 : index
    %c0_15 = arith.constant 0 : index
    %17 = vector.load %arg2[%c0_14, %c0_15] : memref<128x128xi8, #tpu.memory_space<vmem>>, vector<128x128xi8>
    %18 = arith.sitofp %17 : vector<128x128xi8> to vector<128x128xbf16>
    %19 = arith.truncf %15 : vector<128x16xf32> to vector<128x16xbf16>
    %cst_16 = arith.constant dense<0.000000e+00> : vector<128x16xf32>
    %20 = tpu.matmul %18, %19, %cst_16 {dimension_numbers = #tpu.dot_dimension_numbers<[1], [0], [0], [1], [0, 0, 1, 1], [], []>} : vector<128x128xbf16>, vector<128x16xbf16>, vector<128x16xf32> -> vector<128x16xf32>
    %21 = arith.addf %16, %20 : vector<128x16xf32>
    %c0_17 = arith.constant 0 : index
    %c0_18 = arith.constant 0 : index
    %22 = vector.load %arg14[%c0_17, %c0_18] : memref<128x16xf32, #tpu.memory_space<vmem>>, vector<128x16xf32>
    tpu.vector_store %arg14[%c0_17, %c0_18], %21 {strides = array<i32>} : memref<128x16xf32, #tpu.memory_space<vmem>>, vector<128x16xf32>,
    %c3_i32 = arith.constant 3 : i32
    %23 = arith.cmpi eq, %arg1, %c3_i32 : i32
    %24 = arith.extui %23 : i1 to i32
    %c0_i32_19 = arith.constant 0 : i32
    %25 = arith.cmpi ne, %24, %c0_i32_19 : i32
    scf.if %25 {
      %c0_20 = arith.constant 0 : index
      %c0_21 = arith.constant 0 : index
      %26 = vector.load %arg4[%c0_20, %c0_21] : memref<128x16xf32, #tpu.memory_space<vmem>>, vector<128x16xf32>
      %c0_22 = arith.constant 0 : index
      %c0_23 = arith.constant 0 : index
      %27 = vector.load %arg6[%c0_22, %c0_23] : memref<16x16xf32, #tpu.memory_space<vmem>>, vector<16x16xf32>
      %c0_24 = arith.constant 0 : index
      %c0_25 = arith.constant 0 : index
      %28 = vector.load %arg7[%c0_24, %c0_25] : memref<1x16xf32, #tpu.memory_space<vmem>>, vector<1x16xf32>
      %c0_26 = arith.constant 0 : index
      %c0_27 = arith.constant 0 : index
      %29 = vector.load %arg8[%c0_26, %c0_27] : memref<16x16xf32, #tpu.memory_space<vmem>>, vector<16x16xf32>
      %c0_28 = arith.constant 0 : index
      %c0_29 = arith.constant 0 : index
      %30 = vector.load %arg9[%c0_28, %c0_29] : memref<1x16xf32, #tpu.memory_space<vmem>>, vector<1x16xf32>
      %cst_30 = arith.constant dense<0.000000e+00> : vector<128x16xf32>
      %31 = tpu.matmul %26, %27, %cst_30 {dimension_numbers = #tpu.dot_dimension_numbers<[1], [0], [0], [1], [0, 0, 1, 1], [], []>} : vector<128x16xf32>, vector<16x16xf32>, vector<128x16xf32> -> vector<128x16xf32>
      %32 = vector.broadcast %28 : vector<1x16xf32> to vector<128x16xf32>
      %33 = arith.addf %31, %32 : vector<128x16xf32>
      %cst_31 = arith.constant 0.000000e+00 : f32
      %34 = vector.broadcast %cst_31 : f32 to vector<128x16xf32>
      %35 = arith.maximumf %33, %34 : vector<128x16xf32>
      %cst_32 = arith.constant dense<0.000000e+00> : vector<128x16xf32>
      %36 = tpu.matmul %35, %29, %cst_32 {dimension_numbers = #tpu.dot_dimension_numbers<[1], [0], [0], [1], [0, 0, 1, 1], [], []>} : vector<128x16xf32>, vector<16x16xf32>, vector<128x16xf32> -> vector<128x16xf32>
      %37 = vector.broadcast %30 : vector<1x16xf32> to vector<128x16xf32>
      %38 = arith.addf %36, %37 : vector<128x16xf32>
      %c0_33 = arith.constant 0 : index
      %c0_34 = arith.constant 0 : index
      %39 = vector.load %arg14[%c0_33, %c0_34] : memref<128x16xf32, #tpu.memory_space<vmem>>, vector<128x16xf32>
      %c0_35 = arith.constant 0 : index
      %c0_36 = arith.constant 0 : index
      %40 = vector.load %arg5[%c0_35, %c0_36] : memref<128x1xf32, #tpu.memory_space<vmem>>, vector<128x1xf32>
      %41 = vector.broadcast %40 : vector<128x1xf32> to vector<128x16xf32>
      %42 = arith.mulf %39, %41 : vector<128x16xf32>
      %c0_37 = arith.constant 0 : index
      %c0_38 = arith.constant 0 : index
      %43 = vector.load %arg10[%c0_37, %c0_38] : memref<16x32xf32, #tpu.memory_space<vmem>>, vector<16x32xf32>
      %cst_39 = arith.constant dense<0.000000e+00> : vector<128x32xf32>
      %44 = tpu.matmul %42, %43, %cst_39 {dimension_numbers = #tpu.dot_dimension_numbers<[1], [0], [0], [1], [0, 0, 1, 1], [], []>} : vector<128x16xf32>, vector<16x32xf32>, vector<128x32xf32> -> vector<128x32xf32>
      %c0_40 = arith.constant 0 : index
      %c0_41 = arith.constant 0 : index
      %45 = vector.load %arg11[%c0_40, %c0_41] : memref<16x32xf32, #tpu.memory_space<vmem>>, vector<16x32xf32>
      %cst_42 = arith.constant dense<0.000000e+00> : vector<128x32xf32>
      %46 = tpu.matmul %38, %45, %cst_42 {dimension_numbers = #tpu.dot_dimension_numbers<[1], [0], [0], [1], [0, 0, 1, 1], [], []>} : vector<128x16xf32>, vector<16x32xf32>, vector<128x32xf32> -> vector<128x32xf32>
      %47 = arith.addf %44, %46 : vector<128x32xf32>
      %c0_43 = arith.constant 0 : index
      %c0_44 = arith.constant 0 : index
      %48 = vector.load %arg12[%c0_43, %c0_44] : memref<1x32xf32, #tpu.memory_space<vmem>>, vector<1x32xf32>
      %49 = vector.broadcast %48 : vector<1x32xf32> to vector<128x32xf32>
      %50 = arith.addf %47, %49 : vector<128x32xf32>
      %c0_45 = arith.constant 0 : index
      %c0_46 = arith.constant 0 : index
      %51 = vector.load %arg13[%c0_45, %c0_46] : memref<128x32xf32, #tpu.memory_space<vmem>>, vector<128x32xf32>
      tpu.vector_store %arg13[%c0_45, %c0_46], %50 {strides = array<i32>} : memref<128x32xf32, #tpu.memory_space<vmem>>, vector<128x32xf32>,
    } else {
    }
    return
  }
  func.func @transform_0(%arg0: i32, %arg1: i32) -> (i32, i32) {
    %c0_i32 = arith.constant 0 : i32
    return %arg0, %arg1 : i32, i32
  }
  func.func @transform_1(%arg0: i32, %arg1: i32) -> (i32, i32) {
    %c0_i32 = arith.constant 0 : i32
    %c0_i32_0 = arith.constant 0 : i32
    return %arg1, %c0_i32 : i32, i32
  }
  func.func @transform_2(%arg0: i32, %arg1: i32) -> (i32, i32) {
    %c0_i32 = arith.constant 0 : i32
    %c0_i32_0 = arith.constant 0 : i32
    return %arg0, %c0_i32 : i32, i32
  }
  func.func @transform_3(%arg0: i32, %arg1: i32) -> (i32, i32) {
    %c0_i32 = arith.constant 0 : i32
    %c0_i32_0 = arith.constant 0 : i32
    return %arg0, %c0_i32 : i32, i32
  }
  func.func @transform_4(%arg0: i32, %arg1: i32) -> (i32, i32) {
    %c0_i32 = arith.constant 0 : i32
    %c0_i32_0 = arith.constant 0 : i32
    %c0_i32_1 = arith.constant 0 : i32
    return %c0_i32, %c0_i32_0 : i32, i32
  }
  func.func @transform_5(%arg0: i32, %arg1: i32) -> (i32, i32) {
    %c0_i32 = arith.constant 0 : i32
    %c0_i32_0 = arith.constant 0 : i32
    %c0_i32_1 = arith.constant 0 : i32
    return %c0_i32, %c0_i32_0 : i32, i32
  }
  func.func @transform_6(%arg0: i32, %arg1: i32) -> (i32, i32) {
    %c0_i32 = arith.constant 0 : i32
    %c0_i32_0 = arith.constant 0 : i32
    %c0_i32_1 = arith.constant 0 : i32
    return %c0_i32, %c0_i32_0 : i32, i32
  }
  func.func @transform_7(%arg0: i32, %arg1: i32) -> (i32, i32) {
    %c0_i32 = arith.constant 0 : i32
    %c0_i32_0 = arith.constant 0 : i32
    %c0_i32_1 = arith.constant 0 : i32
    return %c0_i32, %c0_i32_0 : i32, i32
  }
  func.func @transform_8(%arg0: i32, %arg1: i32) -> (i32, i32) {
    %c0_i32 = arith.constant 0 : i32
    %c0_i32_0 = arith.constant 0 : i32
    %c0_i32_1 = arith.constant 0 : i32
    return %c0_i32, %c0_i32_0 : i32, i32
  }
  func.func @transform_9(%arg0: i32, %arg1: i32) -> (i32, i32) {
    %c0_i32 = arith.constant 0 : i32
    %c0_i32_0 = arith.constant 0 : i32
    %c0_i32_1 = arith.constant 0 : i32
    return %c0_i32, %c0_i32_0 : i32, i32
  }
  func.func @transform_10(%arg0: i32, %arg1: i32) -> (i32, i32) {
    %c0_i32 = arith.constant 0 : i32
    %c0_i32_0 = arith.constant 0 : i32
    %c0_i32_1 = arith.constant 0 : i32
    return %c0_i32, %c0_i32_0 : i32, i32
  }
  func.func @transform_11(%arg0: i32, %arg1: i32) -> (i32, i32) {
    %c0_i32 = arith.constant 0 : i32
    %c0_i32_0 = arith.constant 0 : i32
    return %arg0, %c0_i32 : i32, i32
  }
}

</mosaic_0001>

<llo_original>
// kernel: tpu_custom_call.1
$region0: #{tpu_custom_call.1}
  #allocation0 [shape = 'u32[]', space=smem, size = 0x4, offset = 0x4, fixed_abs, tag = 'smem constant byte address 0x4 - core index']
  #allocation1 [shape = 'u32[72,128]{1,0:T(1,128)}', space=vmem, size = 0x9000, scoped, tag = 'internal scratch']
  #allocation2 [shape = 'f32[128,16]{1,0:T(8,128)}', space=vmem, size = 0x10000, scoped, tag = 'scratch operand']
  %s0 = inlined_call_operand.vmem [shape: s8[512,512], index: 0, kind: input, shape index: {}]
  %s1 = inlined_call_operand.vmem [shape: f32[512,16], index: 1, kind: input, shape index: {}]
  %s2 = inlined_call_operand.vmem [shape: f32[512,16], index: 2, kind: input, shape index: {}]
  %s3 = inlined_call_operand.vmem [shape: f32[512,1], index: 3, kind: input, shape index: {}]
  %s4 = inlined_call_operand.vmem [shape: f32[16,16], index: 4, kind: input, shape index: {}]
  %s5 = inlined_call_operand.vmem [shape: f32[1,16], index: 5, kind: input, shape index: {}]
  %s6 = inlined_call_operand.vmem [shape: f32[16,16], index: 6, kind: input, shape index: {}]
  %s7 = inlined_call_operand.vmem [shape: f32[1,16], index: 7, kind: input, shape index: {}]
  %s8 = inlined_call_operand.vmem [shape: f32[16,32], index: 8, kind: input, shape index: {}]
  %s9 = inlined_call_operand.vmem [shape: f32[16,32], index: 9, kind: input, shape index: {}]
  %s10 = inlined_call_operand.vmem [shape: f32[1,32], index: 10, kind: input, shape index: {}]
  %s11 = inlined_call_operand.vmem [shape: f32[512,32], index: 11, kind: output, shape index: {}]
  %s12 = sld [smem:[#allocation0]]
  $region123: #{tpu_custom_call.1} parent=0
    _
  %s14 = ssub.s32 1, %s12
  %s15 = scalar_select 0, %s14, %s12
  $region1: #{tpu_custom_call.1} parent=0
    #allocation3 [shape = 'u8[32768]{0}', space=vmem, size = 0x8000, scoped, tag = 'input window, operand 0']
    loop: start=0, step=1, limit=18
    $region2: #{tpu_custom_call.1} parent=1 // loop_pre_header
      _
    $region3: #{tpu_custom_call.1} parent=1 // loop_header
      %s17 = sphi 0, %s21
      %p18 = scmp.ge.s32.totalorder %s17, 18
      %s24 = sphi 0, %s36
      %s25 = sphi 0, %s32
      %s26 = sphi 0, %s24
      %s27 = sphi 0, %s25
      %s28 = sphi 0, %s26
      %s29 = sphi 0, %s27
      %s41 = sphi 0, %s43
      %s44 = sphi 0, %s41
      %s45 = sphi 0, %s44
      %s61 = sphi 0, %s45
      %s67 = sphi 0, %s69
      %s70 = sphi 0, %s67
      %s71 = sphi 0, %s70
      %s87 = sphi 0, %s71
      %s93 = sphi 0, %s95
      %s96 = sphi 0, %s93
      %s97 = sphi 0, %s96
      %s113 = sphi 0, %s97
      %s119 = sphi 0, %s121
      %s122 = sphi 0, %s119
      %s123 = sphi 0, %s122
      %s139 = sphi 0, %s123
      %s143 = sphi 0, %s143
      %s145 = sphi 0, %s143
      %s146 = sphi 0, %s145
      %s160 = sphi 0, %s146
      %s164 = sphi 0, %s164
      %s166 = sphi 0, %s164
      %s167 = sphi 0, %s166
      %s181 = sphi 0, %s167
      %s185 = sphi 0, %s185
      %s187 = sphi 0, %s185
      %s188 = sphi 0, %s187
      %s202 = sphi 0, %s188
      %s206 = sphi 0, %s206
      %s208 = sphi 0, %s206
      %s209 = sphi 0, %s208
      %s223 = sphi 0, %s209
      %s227 = sphi 0, %s227
      %s229 = sphi 0, %s227
      %s230 = sphi 0, %s229
      %s244 = sphi 0, %s230
      %s248 = sphi 0, %s248
      %s250 = sphi 0, %s248
      %s251 = sphi 0, %s250
      %s265 = sphi 0, %s251
      %s269 = sphi 0, %s269
      %s271 = sphi 0, %s269
      %s272 = sphi 0, %s271
      %s286 = sphi 0, %s272
      %s292 = sphi 0, %s294
      %s295 = sphi 0, %s292
      %s296 = sphi 0, %s295
      %s312 = sphi 0, %s296
    $region4: #{tpu_custom_call.1} parent=1 // loop_header_branch
      %20 = sbr.rel (%p18) target = $region8
    $region5: #{tpu_custom_call.1} parent=1 // loop_body
      %s22 = ssub.s32 %s17, 1
      %s23 = ssub.s32 %s17, 2
      %s30 = sadd.s32 1, %s25
      %p31 = scmp.ge.s32.totalorder %s30, 4
      %s32 = scalar_select %p31, 0, %s30
      %s33 = sadd.s32 1, %s24
      %s34 = scalar_select %p31, %s33, %s24
      %p35 = scmp.ge.s32.totalorder %s34, 4
      %s36 = scalar_select %p35, 0, %s34
      %s37 = ssub.s32 %s24, %s36
      %s38 = ssub.s32 %s25, %s32
      %s39 = sor.u32 %s37, %s38
      %p40 = scmp.eq.s32.totalorder %s39, 0
      %s42 = sadd.s32 %s41, 1
      %s43 = scalar_select %p40, %s41, %s42
      %p46 = pneg %p40
      %p47 = scmp.eq.s32.totalorder %s17, 15
      %p48 = por %p46, %p47
      %p49 = scmp.ne.s32.totalorder %s41, %s44
      %p50 = scmp.eq.s32.totalorder %s17, 0
      %p51 = por %p49, %p50
      %p52 = scmp.ne.s32.totalorder %s41, %s44
      %p53 = scmp.eq.s32.totalorder %s22, 15
      %p54 = por %p52, %p53
      %p55 = scmp.ne.s32.totalorder %s44, %s45
      %p56 = scmp.eq.s32.totalorder %s22, 0
      %p57 = por %p55, %p56
      %p58 = scmp.ne.s32.totalorder %s44, %s45
      %p59 = scmp.eq.s32.totalorder %s23, 15
      %p60 = por %p58, %p59
      %p62 = scmp.ne.s32.totalorder %s45, %s61
      %p63 = scmp.eq.s32.totalorder %s23, 0
      %p64 = por %p62, %p63
      %s65 = ssub.s32 %s25, %s32
      %p66 = scmp.eq.s32.totalorder %s65, 0
      %s68 = sadd.s32 %s67, 1
      %s69 = scalar_select %p66, %s67, %s68
      %p72 = pneg %p66
      %p73 = scmp.eq.s32.totalorder %s17, 15
      %p74 = por %p72, %p73
      %p75 = scmp.ne.s32.totalorder %s67, %s70
      %p76 = scmp.eq.s32.totalorder %s17, 0
      %p77 = por %p75, %p76
      %p78 = scmp.ne.s32.totalorder %s67, %s70
      %p79 = scmp.eq.s32.totalorder %s22, 15
      %p80 = por %p78, %p79
      %p81 = scmp.ne.s32.totalorder %s70, %s71
      %p82 = scmp.eq.s32.totalorder %s22, 0
      %p83 = por %p81, %p82
      %p84 = scmp.ne.s32.totalorder %s70, %s71
      %p85 = scmp.eq.s32.totalorder %s23, 15
      %p86 = por %p84, %p85
      %p88 = scmp.ne.s32.totalorder %s71, %s87
      %p89 = scmp.eq.s32.totalorder %s23, 0
      %p90 = por %p88, %p89
      %s91 = ssub.s32 %s24, %s36
      %p92 = scmp.eq.s32.totalorder %s91, 0
      %s94 = sadd.s32 %s93, 1
      %s95 = scalar_select %p92, %s93, %s94
      %p98 = pneg %p92
      %p99 = scmp.eq.s32.totalorder %s17, 15
      %p100 = por %p98, %p99
      %p101 = scmp.ne.s32.totalorder %s93, %s96
      %p102 = scmp.eq.s32.totalorder %s17, 0
      %p103 = por %p101, %p102
      %p104 = scmp.ne.s32.totalorder %s93, %s96
      %p105 = scmp.eq.s32.totalorder %s22, 15
      %p106 = por %p104, %p105
      %p107 = scmp.ne.s32.totalorder %s96, %s97
      %p108 = scmp.eq.s32.totalorder %s22, 0
      %p109 = por %p107, %p108
      %p110 = scmp.ne.s32.totalorder %s96, %s97
      %p111 = scmp.eq.s32.totalorder %s23, 15
      %p112 = por %p110, %p111
      %p114 = scmp.ne.s32.totalorder %s97, %s113
      %p115 = scmp.eq.s32.totalorder %s23, 0
      %p116 = por %p114, %p115
      %s117 = ssub.s32 %s24, %s36
      %p118 = scmp.eq.s32.totalorder %s117, 0
      %s120 = sadd.s32 %s119, 1
      %s121 = scalar_select %p118, %s119, %s120
      %p124 = pneg %p118
      %p125 = scmp.eq.s32.totalorder %s17, 15
      %p126 = por %p124, %p125
      %p127 = scmp.ne.s32.totalorder %s119, %s122
      %p128 = scmp.eq.s32.totalorder %s17, 0
      %p129 = por %p127, %p128
      %p130 = scmp.ne.s32.totalorder %s119, %s122
      %p131 = scmp.eq.s32.totalorder %s22, 15
      %p132 = por %p130, %p131
      %p133 = scmp.ne.s32.totalorder %s122, %s123
      %p134 = scmp.eq.s32.totalorder %s22, 0
      %p135 = por %p133, %p134
      %p136 = scmp.ne.s32.totalorder %s122, %s123
      %p137 = scmp.eq.s32.totalorder %s23, 15
      %p138 = por %p136, %p137
      %p140 = scmp.ne.s32.totalorder %s123, %s139
      %p141 = scmp.eq.s32.totalorder %s23, 0
      %p142 = por %p140, %p141
      %s144 = sadd.s32 %s143, 1
      %p147 = scmp.eq.s32.totalorder %s17, 15
      %p148 = scmp.ne.s32.totalorder %s143, %s145
      %p149 = scmp.eq.s32.totalorder %s17, 0
      %p150 = por %p148, %p149
      %p151 = scmp.ne.s32.totalorder %s143, %s145
      %p152 = scmp.eq.s32.totalorder %s22, 15
      %p153 = por %p151, %p152
      %p154 = scmp.ne.s32.totalorder %s145, %s146
      %p155 = scmp.eq.s32.totalorder %s22, 0
      %p156 = por %p154, %p155
      %p157 = scmp.ne.s32.totalorder %s145, %s146
      %p158 = scmp.eq.s32.totalorder %s23, 15
      %p159 = por %p157, %p158
      %p161 = scmp.ne.s32.totalorder %s146, %s160
      %p162 = scmp.eq.s32.totalorder %s23, 0
      %p163 = por %p161, %p162
      %s165 = sadd.s32 %s164, 1
      %p168 = scmp.eq.s32.totalorder %s17, 15
      %p169 = scmp.ne.s32.totalorder %s164, %s166
      %p170 = scmp.eq.s32.totalorder %s17, 0
      %p171 = por %p169, %p170
      %p172 = scmp.ne.s32.totalorder %s164, %s166
      %p173 = scmp.eq.s32.totalorder %s22, 15
      %p174 = por %p172, %p173
      %p175 = scmp.ne.s32.totalorder %s166, %s167
      %p176 = scmp.eq.s32.totalorder %s22, 0
      %p177 = por %p175, %p176
      %p178 = scmp.ne.s32.totalorder %s166, %s167
      %p179 = scmp.eq.s32.totalorder %s23, 15
      %p180 = por %p178, %p179
      %p182 = scmp.ne.s32.totalorder %s167, %s181
      %p183 = scmp.eq.s32.totalorder %s23, 0
      %p184 = por %p182, %p183
      %s186 = sadd.s32 %s185, 1
      %p189 = scmp.eq.s32.totalorder %s17, 15
      %p190 = scmp.ne.s32.totalorder %s185, %s187
      %p191 = scmp.eq.s32.totalorder %s17, 0
      %p192 = por %p190, %p191
      %p193 = scmp.ne.s32.totalorder %s185, %s187
      %p194 = scmp.eq.s32.totalorder %s22, 15
      %p195 = por %p193, %p194
      %p196 = scmp.ne.s32.totalorder %s187, %s188
      %p197 = scmp.eq.s32.totalorder %s22, 0
      %p198 = por %p196, %p197
      %p199 = scmp.ne.s32.totalorder %s187, %s188
      %p200 = scmp.eq.s32.totalorder %s23, 15
      %p201 = por %p199, %p200
      %p203 = scmp.ne.s32.totalorder %s188, %s202
      %p204 = scmp.eq.s32.totalorder %s23, 0
      %p205 = por %p203, %p204
      %s207 = sadd.s32 %s206, 1
      %p210 = scmp.eq.s32.totalorder %s17, 15
      %p211 = scmp.ne.s32.totalorder %s206, %s208
      %p212 = scmp.eq.s32.totalorder %s17, 0
      %p213 = por %p211, %p212
      %p214 = scmp.ne.s32.totalorder %s206, %s208
      %p215 = scmp.eq.s32.totalorder %s22, 15
      %p216 = por %p214, %p215
      %p217 = scmp.ne.s32.totalorder %s208, %s209
      %p218 = scmp.eq.s32.totalorder %s22, 0
      %p219 = por %p217, %p218
      %p220 = scmp.ne.s32.totalorder %s208, %s209
      %p221 = scmp.eq.s32.totalorder %s23, 15
      %p222 = por %p220, %p221
      %p224 = scmp.ne.s32.totalorder %s209, %s223
      %p225 = scmp.eq.s32.totalorder %s23, 0
      %p226 = por %p224, %p225
      %s228 = sadd.s32 %s227, 1
      %p231 = scmp.eq.s32.totalorder %s17, 15
      %p232 = scmp.ne.s32.totalorder %s227, %s229
      %p233 = scmp.eq.s32.totalorder %s17, 0
      %p234 = por %p232, %p233
      %p235 = scmp.ne.s32.totalorder %s227, %s229
      %p236 = scmp.eq.s32.totalorder %s22, 15
      %p237 = por %p235, %p236
      %p238 = scmp.ne.s32.totalorder %s229, %s230
      %p239 = scmp.eq.s32.totalorder %s22, 0
      %p240 = por %p238, %p239
      %p241 = scmp.ne.s32.totalorder %s229, %s230
      %p242 = scmp.eq.s32.totalorder %s23, 15
      %p243 = por %p241, %p242
      %p245 = scmp.ne.s32.totalorder %s230, %s244
      %p246 = scmp.eq.s32.totalorder %s23, 0
      %p247 = por %p245, %p246
      %s249 = sadd.s32 %s248, 1
      %p252 = scmp.eq.s32.totalorder %s17, 15
      %p253 = scmp.ne.s32.totalorder %s248, %s250
      %p254 = scmp.eq.s32.totalorder %s17, 0
      %p255 = por %p253, %p254
      %p256 = scmp.ne.s32.totalorder %s248, %s250
      %p257 = scmp.eq.s32.totalorder %s22, 15
      %p258 = por %p256, %p257
      %p259 = scmp.ne.s32.totalorder %s250, %s251
      %p260 = scmp.eq.s32.totalorder %s22, 0
      %p261 = por %p259, %p260
      %p262 = scmp.ne.s32.totalorder %s250, %s251
      %p263 = scmp.eq.s32.totalorder %s23, 15
      %p264 = por %p262, %p263
      %p266 = scmp.ne.s32.totalorder %s251, %s265
      %p267 = scmp.eq.s32.totalorder %s23, 0
      %p268 = por %p266, %p267
      %s270 = sadd.s32 %s269, 1
      %p273 = scmp.eq.s32.totalorder %s17, 15
      %p274 = scmp.ne.s32.totalorder %s269, %s271
      %p275 = scmp.eq.s32.totalorder %s17, 0
      %p276 = por %p274, %p275
      %p277 = scmp.ne.s32.totalorder %s269, %s271
      %p278 = scmp.eq.s32.totalorder %s22, 15
      %p279 = por %p277, %p278
      %p280 = scmp.ne.s32.totalorder %s271, %s272
      %p281 = scmp.eq.s32.totalorder %s22, 0
      %p282 = por %p280, %p281
      %p283 = scmp.ne.s32.totalorder %s271, %s272
      %p284 = scmp.eq.s32.totalorder %s23, 15
      %p285 = por %p283, %p284
      %p287 = scmp.ne.s32.totalorder %s272, %s286
      %p288 = scmp.eq.s32.totalorder %s23, 0
      %p289 = por %p287, %p288
      %s290 = ssub.s32 %s24, %s36
      %p291 = scmp.eq.s32.totalorder %s290, 0
      %s293 = sadd.s32 %s292, 1
      %s294 = scalar_select %p291, %s292, %s293
      %p297 = pneg %p291
      %p298 = scmp.eq.s32.totalorder %s17, 15
      %p299 = por %p297, %p298
      %p300 = scmp.ne.s32.totalorder %s292, %s295
      %p301 = scmp.eq.s32.totalorder %s17, 0
      %p302 = por %p300, %p301
      %p303 = scmp.ne.s32.totalorder %s292, %s295
      %p304 = scmp.eq.s32.totalorder %s22, 15
      %p305 = por %p303, %p304
      %p306 = scmp.ne.s32.totalorder %s295, %s296
      %p307 = scmp.eq.s32.totalorder %s22, 0
      %p308 = por %p306, %p307
      %p309 = scmp.ne.s32.totalorder %s295, %s296
      %p310 = scmp.eq.s32.totalorder %s23, 15
      %p311 = por %p309, %p310
      %p313 = scmp.ne.s32.totalorder %s296, %s312
      %p314 = scmp.eq.s32.totalorder %s23, 0
      %p315 = por %p313, %p314
      %p316 = scmp.le.s32.totalorder 1, %s17
      %p317 = scmp.lt.s32.totalorder %s17, 17
      %p318 = pnand %p316, %p317
      %p319 = pneg %p318
      // Predicated region
      $region9: #{tpu_custom_call.1} parent=5 // pred_check
        _
      $region10: #{tpu_custom_call.1} parent=5 // pred_check_branch
        %321 = sbr.rel (%p318) target = $region12
      $region11: #{tpu_custom_call.1} parent=5 // pred_region
        %s322 = ssub.s32 %s17, 1
        // Predicated region
        $region13: #{tpu_custom_call.1} parent=11 // pred_check
          %p323 = pneg %p156
        $region14: #{tpu_custom_call.1} parent=11 // pred_check_branch
          %325 = sbr.rel (%p323) target = $region16
        $region15: #{tpu_custom_call.1} parent=11 // pred_region
          _
        $region16: #{tpu_custom_call.1} parent=11 // pred_fallthru
          _
        // Predicated region
        $region17: #{tpu_custom_call.1} parent=11 // pred_check
          %p326 = pneg %p177
        $region18: #{tpu_custom_call.1} parent=11 // pred_check_branch
          %328 = sbr.rel (%p326) target = $region20
        $region19: #{tpu_custom_call.1} parent=11 // pred_region
          _
        $region20: #{tpu_custom_call.1} parent=11 // pred_fallthru
          _
        // Predicated region
        $region21: #{tpu_custom_call.1} parent=11 // pred_check
          %p329 = pneg %p198
        $region22: #{tpu_custom_call.1} parent=11 // pred_check_branch
          %331 = sbr.rel (%p329) target = $region24
        $region23: #{tpu_custom_call.1} parent=11 // pred_region
          _
        $region24: #{tpu_custom_call.1} parent=11 // pred_fallthru
          _
        // Predicated region
        $region25: #{tpu_custom_call.1} parent=11 // pred_check
          %p332 = pneg %p219
        $region26: #{tpu_custom_call.1} parent=11 // pred_check_branch
          %334 = sbr.rel (%p332) target = $region28
        $region27: #{tpu_custom_call.1} parent=11 // pred_region
          _
        $region28: #{tpu_custom_call.1} parent=11 // pred_fallthru
          _
        // Predicated region
        $region29: #{tpu_custom_call.1} parent=11 // pred_check
          %p335 = pneg %p240
        $region30: #{tpu_custom_call.1} parent=11 // pred_check_branch
          %337 = sbr.rel (%p335) target = $region32
        $region31: #{tpu_custom_call.1} parent=11 // pred_region
          _
        $region32: #{tpu_custom_call.1} parent=11 // pred_fallthru
          _
        // Predicated region
        $region33: #{tpu_custom_call.1} parent=11 // pred_check
          %p338 = pneg %p261
        $region34: #{tpu_custom_call.1} parent=11 // pred_check_branch
          %340 = sbr.rel (%p338) target = $region36
        $region35: #{tpu_custom_call.1} parent=11 // pred_region
          _
        $region36: #{tpu_custom_call.1} parent=11 // pred_fallthru
          _
        // Predicated region
        $region37: #{tpu_custom_call.1} parent=11 // pred_check
          %p341 = pneg %p282
        $region38: #{tpu_custom_call.1} parent=11 // pred_check_branch
          %343 = sbr.rel (%p341) target = $region40
        $region39: #{tpu_custom_call.1} parent=11 // pred_region
          _
        $region40: #{tpu_custom_call.1} parent=11 // pred_fallthru
          _
      $region12: #{tpu_custom_call.1} parent=5 // pred_fallthru
        _
      %p344 = scmp.lt.s32.totalorder %s17, 16
      // Predicated region
      $region41: #{tpu_custom_call.1} parent=5 // pred_check
        %p345 = pneg %p344
      $region42: #{tpu_custom_call.1} parent=5 // pred_check_branch
        %347 = sbr.rel (%p345) target = $region44
      $region43: #{tpu_custom_call.1} parent=5 // pred_region
        // Predicated region
        $region45: #{tpu_custom_call.1} parent=43 // pred_check
          %p348 = pneg %p51
        $region46: #{tpu_custom_call.1} parent=43 // pred_check_branch
          %350 = sbr.rel (%p348) target = $region48
        $region47: #{tpu_custom_call.1} parent=43 // pred_region
          %s351 = sand.u32 %s41, 1
          %s352 = sand.u32 %s41, 1
          %s353 = smul.addr %s352, 32
          %s354 = scalar_lea.vmem [#allocation3], %s353
          %s355 = smul.u32 4, %s24
          %s356 = smul.addr %s355, 4
          %s357 = sadd.s32 %s25, %s356
          %s358 = smul.addr %s357, 8
          %s359 = scalar_lea.vmem %s0, %s358
          // Predicated region
          $region49: #{tpu_custom_call.1} parent=47 // pred_check
            _
          $region50: #{tpu_custom_call.1} parent=47 // pred_check_branch
            %361 = sbr.rel (0) target = $region52
          $region51: #{tpu_custom_call.1} parent=47 // pred_region
            // Predicated region
            $region53: #{tpu_custom_call.1} parent=51 // pred_check
              _
            $region54: #{tpu_custom_call.1} parent=51 // pred_check_branch
              %363 = sbr.rel (0) target = $region56
            $region55: #{tpu_custom_call.1} parent=51 // pred_region
              // Predicated region
              $region68: #{tpu_custom_call.1} parent=55 // pred_check
                _
              $region69: #{tpu_custom_call.1} parent=55 // pred_check_branch
                %385 = sbr.rel (0) target = $region71
              $region70: #{tpu_custom_call.1} parent=55 // pred_region
                loop: start=0, step=1, limit=1
                $region72: #{tpu_custom_call.1} parent=70 // loop_pre_header
                  _
                $region73: #{tpu_custom_call.1} parent=70 // loop_header
                  %s387 = sphi 0, %s391
                  %p388 = scmp.ge.s32.totalorder %s387, 1
                  %s392 = sphi %s359, %s359
                  %s393 = sphi %s354, %s354
                $region74: #{tpu_custom_call.1} parent=70 // loop_header_branch
                  %390 = sbr.rel (%p388) target = $region78
                $region75: #{tpu_custom_call.1} parent=70 // loop_body
                  %v394 = vld [vmem:[%s392] sm:$0xff]
                  %395 = vst [vmem:[%s393] sm:$0xff] %v394
                  %v396 = vld [vmem:[%s392 + $0x20] sm:$0xff]
                  %397 = vst [vmem:[%s393 + $0x8] sm:$0xff] %v396
                  %v398 = vld [vmem:[%s392 + $0x40] sm:$0xff]
                  %399 = vst [vmem:[%s393 + $0x10] sm:$0xff] %v398
                  %v400 = vld [vmem:[%s392 + $0x60] sm:$0xff]
                  %401 = vst [vmem:[%s393 + $0x18] sm:$0xff] %v400
                $region76: #{tpu_custom_call.1} parent=70 // loop_footer
                  %s391 = sadd.s32 1, %s387
                $region77: #{tpu_custom_call.1} parent=70 // loop_footer_branch
                  %386 = sbr.rel target = $region73
                $region78: #{tpu_custom_call.1} parent=70 // loop_exit
                  _
              $region71: #{tpu_custom_call.1} parent=55 // pred_fallthru
                _
              // Predicated region
              $region79: #{tpu_custom_call.1} parent=55 // pred_check
                _
              $region80: #{tpu_custom_call.1} parent=55 // pred_check_branch
                %403 = sbr.rel target = $region82
              $region81: #{tpu_custom_call.1} parent=55 // pred_region
                _
              $region82: #{tpu_custom_call.1} parent=55 // pred_fallthru
                _
            $region56: #{tpu_custom_call.1} parent=51 // pred_fallthru
              _
            // Predicated region
            $region57: #{tpu_custom_call.1} parent=51 // pred_check
              _
            $region58: #{tpu_custom_call.1} parent=51 // pred_check_branch
              %365 = sbr.rel target = $region60
            $region59: #{tpu_custom_call.1} parent=51 // pred_region
              %s367 = ssub.s32 256, 1
              loop: start=0, step=1, limit=1
              $region61: #{tpu_custom_call.1} parent=59 // loop_pre_header
                _
              $region62: #{tpu_custom_call.1} parent=59 // loop_header
                %s369 = sphi 0, %s373
                %p370 = scmp.ge.s32.totalorder %s369, 1
                %s374 = sphi %s359, %s359
                %s375 = sphi %s354, %s354
              $region63: #{tpu_custom_call.1} parent=59 // loop_header_branch
                %372 = sbr.rel (%p370) target = $region67
              $region64: #{tpu_custom_call.1} parent=59 // loop_body
                %v376 = vld [vmem:[%s374] sm:%s367]
                %377 = vst [vmem:[%s375] sm:%s367] %v376
                %v378 = vld [vmem:[%s374 + $0x20] sm:%s367]
                %379 = vst [vmem:[%s375 + $0x8] sm:%s367] %v378
                %v380 = vld [vmem:[%s374 + $0x40] sm:%s367]
                %381 = vst [vmem:[%s375 + $0x10] sm:%s367] %v380
                %v382 = vld [vmem:[%s374 + $0x60] sm:%s367]
                %383 = vst [vmem:[%s375 + $0x18] sm:%s367] %v382
              $region65: #{tpu_custom_call.1} parent=59 // loop_footer
                %s373 = sadd.s32 1, %s369
              $region66: #{tpu_custom_call.1} parent=59 // loop_footer_branch
                %368 = sbr.rel target = $region62
              $region67: #{tpu_custom_call.1} parent=59 // loop_exit
                _
            $region60: #{tpu_custom_call.1} parent=51 // pred_fallthru
              _
          $region52: #{tpu_custom_call.1} parent=47 // pred_fallthru
            _
          %404 = vnop
        $region48: #{tpu_custom_call.1} parent=43 // pred_fallthru
          _
        // Predicated region
        $region83: #{tpu_custom_call.1} parent=43 // pred_check
          %p405 = pneg %p77
        $region84: #{tpu_custom_call.1} parent=43 // pred_check_branch
          %407 = sbr.rel (%p405) target = $region86
        $region85: #{tpu_custom_call.1} parent=43 // pred_region
          %s408 = smul.u32 16, %s25
          %p409 = scmp.lt.s32.totalorder %s408, 63
          %s410 = scalar_select %p409, %s408, 63
          %s411 = smul.addr %s410, 8
          %s412 = scalar_lea.vmem %s1, %s411
          %s413 = smul.u32 16, %s25
        $region86: #{tpu_custom_call.1} parent=43 // pred_fallthru
          _
        // Predicated region
        $region87: #{tpu_custom_call.1} parent=43 // pred_check
          %p414 = pneg %p103
        $region88: #{tpu_custom_call.1} parent=43 // pred_check_branch
          %416 = sbr.rel (%p414) target = $region90
        $region89: #{tpu_custom_call.1} parent=43 // pred_region
          %s417 = smul.u32 16, %s24
          %p418 = scmp.lt.s32.totalorder %s417, 63
          %s419 = scalar_select %p418, %s417, 63
          %s420 = smul.addr %s419, 8
          %s421 = scalar_lea.vmem %s2, %s420
          %s422 = smul.u32 16, %s24
        $region90: #{tpu_custom_call.1} parent=43 // pred_fallthru
          _
        // Predicated region
        $region91: #{tpu_custom_call.1} parent=43 // pred_check
          %p423 = pneg %p129
        $region92: #{tpu_custom_call.1} parent=43 // pred_check_branch
          %425 = sbr.rel (%p423) target = $region94
        $region93: #{tpu_custom_call.1} parent=43 // pred_region
          %s426 = smul.u32 16, %s24
          %p427 = scmp.lt.s32.totalorder %s426, 63
          %s428 = scalar_select %p427, %s426, 63
          %s429 = smul.addr %s428, 8
          %s430 = scalar_lea.vmem %s3, %s429
          %s431 = smul.u32 16, %s24
        $region94: #{tpu_custom_call.1} parent=43 // pred_fallthru
          _
      $region44: #{tpu_custom_call.1} parent=5 // pred_fallthru
        _
      %p432 = scmp.le.s32.totalorder 1, %s17
      %p433 = scmp.lt.s32.totalorder %s17, 17
      %p434 = pnand %p432, %p433
      %p435 = pneg %p434
      // Predicated region
      $region95: #{tpu_custom_call.1} parent=5 // pred_check
        _
      $region96: #{tpu_custom_call.1} parent=5 // pred_check_branch
        %437 = sbr.rel (%p434) target = $region98
      $region97: #{tpu_custom_call.1} parent=5 // pred_region
        %s438 = ssub.s32 %s17, 1
        %s439 = sand.u32 %s44, 1
        %s440 = sand.u32 %s44, 1
        %s441 = smul.addr %s440, 32
        %s442 = scalar_lea.vmem [#allocation3], %s441
        // Predicated region
        $region99: #{tpu_custom_call.1} parent=97 // pred_check
          %p443 = pneg %p57
        $region100: #{tpu_custom_call.1} parent=97 // pred_check_branch
          %445 = sbr.rel (%p443) target = $region102
        $region101: #{tpu_custom_call.1} parent=97 // pred_region
          _
        $region102: #{tpu_custom_call.1} parent=97 // pred_fallthru
          _
        %s446 = sand.u32 %s44, 1
        %s447 = sand.u32 %s44, 1
        %s448 = smul.addr %s447, 32
        %s449 = scalar_lea.vmem [#allocation3], %s448
        %p450 = pneg %p57
        %p451 = pneg %p54
        %s452 = smul.u32 16, %s27
        %p453 = scmp.lt.s32.totalorder %s452, 63
        %s454 = scalar_select %p453, %s452, 63
        %s455 = smul.addr %s454, 8
        %s456 = scalar_lea.vmem %s1, %s455
        %p457 = pneg %p83
        %p458 = pneg %p80
        %s459 = smul.u32 16, %s26
        %p460 = scmp.lt.s32.totalorder %s459, 63
        %s461 = scalar_select %p460, %s459, 63
        %s462 = smul.addr %s461, 8
        %s463 = scalar_lea.vmem %s2, %s462
        %p464 = pneg %p109
        %p465 = pneg %p106
        %s466 = smul.u32 16, %s26
        %p467 = scmp.lt.s32.totalorder %s466, 63
        %s468 = scalar_select %p467, %s466, 63
        %s469 = smul.addr %s468, 8
        %s470 = scalar_lea.vmem %s3, %s469
        %p471 = pneg %p135
        %p472 = pneg %p132
        %p473 = pneg %p156
        %p474 = pneg %p153
        %p475 = pneg %p177
        %p476 = pneg %p174
        %p477 = pneg %p198
        %p478 = pneg %p195
        %p479 = pneg %p219
        %p480 = pneg %p216
        %p481 = pneg %p240
        %p482 = pneg %p237
        %p483 = pneg %p261
        %p484 = pneg %p258
        %p485 = pneg %p282
        %p486 = pneg %p279
        %p487 = pneg %p308
        %p488 = pneg %p305
        %s489 = smul.u32 16, %s26
        %p490 = scmp.lt.s32.totalorder %s489, 63
        %s491 = scalar_select %p490, %s489, 63
        %s492 = smul.addr %s491, 8
        %s493 = scalar_lea.vmem %s11, %s492
        %s494 = smul.u32 4, %s26
        %s495 = smul.u32 16, %s27
        %p496 = scmp.lt.s32.totalorder %s495, 63
        %s497 = scalar_select %p496, %s495, 63
        %s498 = smul.addr %s497, 8
        %s499 = scalar_lea.vmem %s1, %s498
        %s500 = smul.u32 16, %s27
        %s501 = smul.u32 16, %s26
        %p502 = scmp.lt.s32.totalorder %s501, 63
        %s503 = scalar_select %p502, %s501, 63
        %s504 = smul.addr %s503, 8
        %s505 = scalar_lea.vmem %s2, %s504
        %s506 = smul.u32 16, %s26
        %s507 = smul.u32 16, %s26
        %p508 = scmp.lt.s32.totalorder %s507, 63
        %s509 = scalar_select %p508, %s507, 63
        %s510 = smul.addr %s509, 8
        %s511 = scalar_lea.vmem %s3, %s510
        %s512 = smul.u32 16, %s26
        %s513 = smul.u32 16, %s26
        %p514 = scmp.lt.s32.totalorder %s513, 63
        %s515 = scalar_select %p514, %s513, 63
        %s516 = smul.addr %s515, 8
        %s517 = scalar_lea.vmem %s11, %s516
        %s518 = smul.u32 16, %s26
        %p519 = scmp.eq.s32.totalorder %s27, 0
        // Predicated region
        $region103: #{tpu_custom_call.1} parent=97 // pred_check
          %p520 = pneg %p519
        $region104: #{tpu_custom_call.1} parent=97 // pred_check_branch
          %522 = sbr.rel (%p520) target = $region106
        $region105: #{tpu_custom_call.1} parent=97 // pred_region
          %vm523 = vcmask 130048
          %524 = vst.msk [vmem:[#allocation2] sm:$0xff] %vm523, 0.0
          %525 = vst.msk [vmem:[#allocation2 + $0x8] sm:$0xff] %vm523, 0.0
          %526 = vst.msk [vmem:[#allocation2 + $0x10] sm:$0xff] %vm523, 0.0
          %527 = vst.msk [vmem:[#allocation2 + $0x18] sm:$0xff] %vm523, 0.0
          %528 = vst.msk [vmem:[#allocation2 + $0x20] sm:$0xff] %vm523, 0.0
          %529 = vst.msk [vmem:[#allocation2 + $0x28] sm:$0xff] %vm523, 0.0
          %530 = vst.msk [vmem:[#allocation2 + $0x30] sm:$0xff] %vm523, 0.0
          %531 = vst.msk [vmem:[#allocation2 + $0x38] sm:$0xff] %vm523, 0.0
          %532 = vst.msk [vmem:[#allocation2 + $0x40] sm:$0xff] %vm523, 0.0
          %533 = vst.msk [vmem:[#allocation2 + $0x48] sm:$0xff] %vm523, 0.0
          %534 = vst.msk [vmem:[#allocation2 + $0x50] sm:$0xff] %vm523, 0.0
          %535 = vst.msk [vmem:[#allocation2 + $0x58] sm:$0xff] %vm523, 0.0
          %536 = vst.msk [vmem:[#allocation2 + $0x60] sm:$0xff] %vm523, 0.0
          %537 = vst.msk [vmem:[#allocation2 + $0x68] sm:$0xff] %vm523, 0.0
          %538 = vst.msk [vmem:[#allocation2 + $0x70] sm:$0xff] %vm523, 0.0
          %539 = vst.msk [vmem:[#allocation2 + $0x78] sm:$0xff] %vm523, 0.0
        $region106: #{tpu_custom_call.1} parent=97 // pred_fallthru
          _
        %v540 = vld [vmem:[%s499] sm:$0xff]
        %v541 = vld [vmem:[%s499 + $0x8] sm:$0xff]
        %v542 = vld [vmem:[%s499 + $0x10] sm:$0xff]
        %v543 = vld [vmem:[%s499 + $0x18] sm:$0xff]
        %v544 = vld [vmem:[%s499 + $0x20] sm:$0xff]
        %v545 = vld [vmem:[%s499 + $0x28] sm:$0xff]
        %v546 = vld [vmem:[%s499 + $0x30] sm:$0xff]
        %v547 = vld [vmem:[%s499 + $0x38] sm:$0xff]
        %v548 = vld [vmem:[%s499 + $0x40] sm:$0xff]
        %v549 = vld [vmem:[%s499 + $0x48] sm:$0xff]
        %v550 = vld [vmem:[%s499 + $0x50] sm:$0xff]
        %v551 = vld [vmem:[%s499 + $0x58] sm:$0xff]
        %v552 = vld [vmem:[%s499 + $0x60] sm:$0xff]
        %v553 = vld [vmem:[%s499 + $0x68] sm:$0xff]
        %v554 = vld [vmem:[%s499 + $0x70] sm:$0xff]
        %v555 = vld [vmem:[%s499 + $0x78] sm:$0xff]
        %v556 = vld [vmem:[%s4] sm:$0xff]
        %v557 = vld [vmem:[%s4 + $0x8] sm:$0xff]
        %v558 = vld [vmem:[%s5] sm:$0x1]
        %v559 = vld [vmem:[%s6] sm:$0xff]
        %v560 = vld [vmem:[%s6 + $0x8] sm:$0xff]
        %v561 = vld [vmem:[%s7] sm:$0x1]
        %v563 = vperm.slane %v558, 0
        %vm565 = vcmask 130048
        %v567 = vsel %vm565, %v540, 0
        %v570 = vsel %vm565, %v541, 0
        %v573 = vsel %vm565, %v542, 0
        %v576 = vsel %vm565, %v543, 0
        %v579 = vsel %vm565, %v544, 0
        %v582 = vsel %vm565, %v545, 0
        %v585 = vsel %vm565, %v546, 0
        %v588 = vsel %vm565, %v547, 0
        %v591 = vsel %vm565, %v548, 0
        %v594 = vsel %vm565, %v549, 0
        %v597 = vsel %vm565, %v550, 0
        %v600 = vsel %vm565, %v551, 0
        %v603 = vsel %vm565, %v552, 0
        %v606 = vsel %vm565, %v553, 0
        %v609 = vsel %vm565, %v554, 0
        %v612 = vsel %vm565, %v555, 0
        %614 = vmatpush.msra.mxu0 0.0
        %615 = vmatpush.msra.mxu0 0.0
        %616 = vmatpush.msra.mxu0 0.0
        %617 = vmatpush.msra.mxu0 0.0
        %618 = vmatpush.msra.mxu0 0.0
        %619 = vmatpush.msra.mxu0 0.0
        %620 = vmatpush.msra.mxu0 0.0
        %621 = vmatpush.msra.mxu0 0.0
        %622 = vmatpush.msra.mxu0 0.0
        %623 = vmatpush.msra.mxu0 0.0
        %624 = vmatpush.msra.mxu0 0.0
        %625 = vmatpush.msra.mxu0 0.0
        %626 = vmatpush.msra.mxu0 0.0
        %627 = vmatpush.msra.mxu0 0.0
        %628 = vmatpush.msra.mxu0 %v557
        %629 = vmatpush.msra.mxu0 %v556
        %630 = vmatmul.f32.gmra.mxu0 %v567
        %v631 = vpop.f32.mrf.mxu0
        %v632 = vadd.f32 %v563, %v631
        %633 = vmatmul.f32.gmra.mxu0 %v570
        %v634 = vpop.f32.mrf.mxu0
        %v635 = vadd.f32 %v563, %v634
        %636 = vmatmul.f32.gmra.mxu0 %v573
        %v637 = vpop.f32.mrf.mxu0
        %v638 = vadd.f32 %v563, %v637
        %639 = vmatmul.f32.gmra.mxu0 %v576
        %v640 = vpop.f32.mrf.mxu0
        %v641 = vadd.f32 %v563, %v640
        %642 = vmatmul.f32.gmra.mxu0 %v579
        %v643 = vpop.f32.mrf.mxu0
        %v644 = vadd.f32 %v563, %v643
        %645 = vmatmul.f32.gmra.mxu0 %v582
        %v646 = vpop.f32.mrf.mxu0
        %v647 = vadd.f32 %v563, %v646
        %648 = vmatmul.f32.gmra.mxu0 %v585
        %v649 = vpop.f32.mrf.mxu0
        %v650 = vadd.f32 %v563, %v649
        %651 = vmatmul.f32.gmra.mxu0 %v588
        %v652 = vpop.f32.mrf.mxu0
        %v653 = vadd.f32 %v563, %v652
        %654 = vmatmul.f32.gmra.mxu0 %v591
        %v655 = vpop.f32.mrf.mxu0
        %v656 = vadd.f32 %v563, %v655
        %657 = vmatmul.f32.gmra.mxu0 %v594
        %v658 = vpop.f32.mrf.mxu0
        %v659 = vadd.f32 %v563, %v658
        %660 = vmatmul.f32.gmra.mxu0 %v597
        %v661 = vpop.f32.mrf.mxu0
        %v662 = vadd.f32 %v563, %v661
        %663 = vmatmul.f32.gmra.mxu0 %v600
        %v664 = vpop.f32.mrf.mxu0
        %v665 = vadd.f32 %v563, %v664
        %666 = vmatmul.f32.gmra.mxu0 %v603
        %v667 = vpop.f32.mrf.mxu0
        %v668 = vadd.f32 %v563, %v667
        %669 = vmatmul.f32.gmra.mxu0 %v606
        %v670 = vpop.f32.mrf.mxu0
        %v671 = vadd.f32 %v563, %v670
        %672 = vmatmul.f32.gmra.mxu0 %v609
        %v673 = vpop.f32.mrf.mxu0
        %v674 = vadd.f32 %v563, %v673
        %675 = vmatmul.f32.gmra.mxu0 %v612
        %v676 = vpop.f32.mrf.mxu0
        %v677 = vadd.f32 %v563, %v676
        %678 = vdwg.mxu0
        %v679 = vmax.f32 %v632, 0.0
        %v680 = vmax.f32 %v635, 0.0
        %v681 = vmax.f32 %v638, 0.0
        %v682 = vmax.f32 %v641, 0.0
        %v683 = vmax.f32 %v644, 0.0
        %v684 = vmax.f32 %v647, 0.0
        %v685 = vmax.f32 %v650, 0.0
        %v686 = vmax.f32 %v653, 0.0
        %v687 = vmax.f32 %v656, 0.0
        %v688 = vmax.f32 %v659, 0.0
        %v689 = vmax.f32 %v662, 0.0
        %v690 = vmax.f32 %v665, 0.0
        %v691 = vmax.f32 %v668, 0.0
        %v692 = vmax.f32 %v671, 0.0
        %v693 = vmax.f32 %v674, 0.0
        %v694 = vmax.f32 %v677, 0.0
        %v696 = vperm.slane %v561, 0
        %v699 = vsel %vm565, %v679, 0
        %v702 = vsel %vm565, %v680, 0
        %v705 = vsel %vm565, %v681, 0
        %v708 = vsel %vm565, %v682, 0
        %v711 = vsel %vm565, %v683, 0
        %v714 = vsel %vm565, %v684, 0
        %v717 = vsel %vm565, %v685, 0
        %v720 = vsel %vm565, %v686, 0
        %v723 = vsel %vm565, %v687, 0
        %v726 = vsel %vm565, %v688, 0
        %v729 = vsel %vm565, %v689, 0
        %v732 = vsel %vm565, %v690, 0
        %v735 = vsel %vm565, %v691, 0
        %v738 = vsel %vm565, %v692, 0
        %v741 = vsel %vm565, %v693, 0
        %v744 = vsel %vm565, %v694, 0
        %746 = vmatpush.msra.mxu0 0.0
        %747 = vmatpush.msra.mxu0 0.0
        %748 = vmatpush.msra.mxu0 0.0
        %749 = vmatpush.msra.mxu0 0.0
        %750 = vmatpush.msra.mxu0 0.0
        %751 = vmatpush.msra.mxu0 0.0
        %752 = vmatpush.msra.mxu0 0.0
        %753 = vmatpush.msra.mxu0 0.0
        %754 = vmatpush.msra.mxu0 0.0
        %755 = vmatpush.msra.mxu0 0.0
        %756 = vmatpush.msra.mxu0 0.0
        %757 = vmatpush.msra.mxu0 0.0
        %758 = vmatpush.msra.mxu0 0.0
        %759 = vmatpush.msra.mxu0 0.0
        %760 = vmatpush.msra.mxu0 %v560
        %761 = vmatpush.msra.mxu0 %v559
        %762 = vmatmul.f32.gmra.mxu0 %v699
        %v763 = vpop.f32.mrf.mxu0
        %v764 = vadd.f32 %v696, %v763
        %765 = vmatmul.f32.gmra.mxu0 %v702
        %v766 = vpop.f32.mrf.mxu0
        %v767 = vadd.f32 %v696, %v766
        %768 = vmatmul.f32.gmra.mxu0 %v705
        %v769 = vpop.f32.mrf.mxu0
        %v770 = vadd.f32 %v696, %v769
        %771 = vmatmul.f32.gmra.mxu0 %v708
        %v772 = vpop.f32.mrf.mxu0
        %v773 = vadd.f32 %v696, %v772
        %774 = vmatmul.f32.gmra.mxu0 %v711
        %v775 = vpop.f32.mrf.mxu0
        %v776 = vadd.f32 %v696, %v775
        %777 = vmatmul.f32.gmra.mxu0 %v714
        %v778 = vpop.f32.mrf.mxu0
        %v779 = vadd.f32 %v696, %v778
        %780 = vmatmul.f32.gmra.mxu0 %v717
        %v781 = vpop.f32.mrf.mxu0
        %v782 = vadd.f32 %v696, %v781
        %783 = vmatmul.f32.gmra.mxu0 %v720
        %v784 = vpop.f32.mrf.mxu0
        %v785 = vadd.f32 %v696, %v784
        %786 = vmatmul.f32.gmra.mxu0 %v723
        %v787 = vpop.f32.mrf.mxu0
        %v788 = vadd.f32 %v696, %v787
        %789 = vmatmul.f32.gmra.mxu0 %v726
        %v790 = vpop.f32.mrf.mxu0
        %v791 = vadd.f32 %v696, %v790
        %792 = vmatmul.f32.gmra.mxu0 %v729
        %v793 = vpop.f32.mrf.mxu0
        %v794 = vadd.f32 %v696, %v793
        %795 = vmatmul.f32.gmra.mxu0 %v732
        %v796 = vpop.f32.mrf.mxu0
        %v797 = vadd.f32 %v696, %v796
        %798 = vmatmul.f32.gmra.mxu0 %v735
        %v799 = vpop.f32.mrf.mxu0
        %v800 = vadd.f32 %v696, %v799
        %801 = vmatmul.f32.gmra.mxu0 %v738
        %v802 = vpop.f32.mrf.mxu0
        %v803 = vadd.f32 %v696, %v802
        %804 = vmatmul.f32.gmra.mxu0 %v741
        %v805 = vpop.f32.mrf.mxu0
        %v806 = vadd.f32 %v696, %v805
        %807 = vmatmul.f32.gmra.mxu0 %v744
        %v808 = vpop.f32.mrf.mxu0
        %v809 = vadd.f32 %v696, %v808
        %810 = vdwg.mxu0
        %v811 = vld [vmem:[#allocation2] sm:$0xff]
        %v812 = vld [vmem:[#allocation2 + $0x8] sm:$0xff]
        %v813 = vld [vmem:[#allocation2 + $0x10] sm:$0xff]
        %v814 = vld [vmem:[#allocation2 + $0x18] sm:$0xff]
        %v815 = vld [vmem:[#allocation2 + $0x20] sm:$0xff]
        %v816 = vld [vmem:[#allocation2 + $0x28] sm:$0xff]
        %v817 = vld [vmem:[#allocation2 + $0x30] sm:$0xff]
        %v818 = vld [vmem:[#allocation2 + $0x38] sm:$0xff]
        %v819 = vld [vmem:[#allocation2 + $0x40] sm:$0xff]
        %v820 = vld [vmem:[#allocation2 + $0x48] sm:$0xff]
        %v821 = vld [vmem:[#allocation2 + $0x50] sm:$0xff]
        %v822 = vld [vmem:[#allocation2 + $0x58] sm:$0xff]
        %v823 = vld [vmem:[#allocation2 + $0x60] sm:$0xff]
        %v824 = vld [vmem:[#allocation2 + $0x68] sm:$0xff]
        %v825 = vld [vmem:[#allocation2 + $0x70] sm:$0xff]
        %v826 = vld [vmem:[#allocation2 + $0x78] sm:$0xff]
        %v827 = vld [vmem:[%s442] sm:$0xff]
        %v828 = vld [vmem:[%s442 + $0x8] sm:$0xff]
        %v829 = vld [vmem:[%s442 + $0x10] sm:$0xff]
        %v830 = vld [vmem:[%s442 + $0x18] sm:$0xff]
        %v831 = vunpack.c.0.s8 %v827
        %v832 = vunpack.c.1.s8 %v827
        %v833 = vunpack.c.2.s8 %v827
        %v834 = vunpack.c.3.s8 %v827
        %v835 = vunpack.c.0.s8 %v828
        %v836 = vunpack.c.1.s8 %v828
        %v837 = vunpack.c.2.s8 %v828
        %v838 = vunpack.c.3.s8 %v828
        %v839 = vunpack.c.0.s8 %v829
        %v840 = vunpack.c.1.s8 %v829
        %v841 = vunpack.c.2.s8 %v829
        %v842 = vunpack.c.3.s8 %v829
        %v843 = vunpack.c.0.s8 %v830
        %v844 = vunpack.c.1.s8 %v830
        %v845 = vunpack.c.2.s8 %v830
        %v846 = vunpack.c.3.s8 %v830
        %v847 = vcvt.s32.f32 %v831
        %v848 = vcvt.s32.f32 %v832
        %v849 = vcvt.s32.f32 %v833
        %v850 = vcvt.s32.f32 %v834
        %v851 = vcvt.s32.f32 %v835
        %v852 = vcvt.s32.f32 %v836
        %v853 = vcvt.s32.f32 %v837
        %v854 = vcvt.s32.f32 %v838
        %v855 = vcvt.s32.f32 %v839
        %v856 = vcvt.s32.f32 %v840
        %v857 = vcvt.s32.f32 %v841
        %v858 = vcvt.s32.f32 %v842
        %v859 = vcvt.s32.f32 %v843
        %v860 = vcvt.s32.f32 %v844
        %v861 = vcvt.s32.f32 %v845
        %v862 = vcvt.s32.f32 %v846
        %v863 = vpack.c.bf16 %v848, %v847
        %v864 = vpack.c.bf16 %v850, %v849
        %v865 = vpack.c.bf16 %v852, %v851
        %v866 = vpack.c.bf16 %v854, %v853
        %v867 = vpack.c.bf16 %v856, %v855
        %v868 = vpack.c.bf16 %v858, %v857
        %v869 = vpack.c.bf16 %v860, %v859
        %v870 = vpack.c.bf16 %v862, %v861
        %v871 = vpack.c.bf16 %v767, %v764
        %v872 = vpack.c.bf16 %v773, %v770
        %v873 = vpack.c.bf16 %v779, %v776
        %v874 = vpack.c.bf16 %v785, %v782
        %v875 = vpack.c.bf16 %v791, %v788
        %v876 = vpack.c.bf16 %v797, %v794
        %v877 = vpack.c.bf16 %v803, %v800
        %v878 = vpack.c.bf16 %v809, %v806
        %879 = vmatpush.bf16.msra.mxu0 %v878
        %880 = vmatpush.bf16.msra.mxu0 %v877
        %881 = vmatpush.bf16.msra.mxu0 %v876
        %882 = vmatpush.bf16.msra.mxu0 %v875
        %883 = vmatpush.bf16.msra.mxu0 %v874
        %884 = vmatpush.bf16.msra.mxu0 %v873
        %885 = vmatpush.bf16.msra.mxu0 %v872
        %886 = vmatpush.bf16.msra.mxu0 %v871
        %887 = vmatmul.bf16.gmra.mxu0 %v863
        %v888 = vpop.f32.mrf.mxu0
        %v889 = vadd.f32 0.0, %v888
        %v890 = vpop.f32.mrf.mxu0
        %v891 = vadd.f32 0.0, %v890
        %892 = vmatmul.bf16.gmra.mxu0 %v864
        %v893 = vpop.f32.mrf.mxu0
        %v894 = vadd.f32 0.0, %v893
        %v895 = vpop.f32.mrf.mxu0
        %v896 = vadd.f32 0.0, %v895
        %897 = vmatmul.bf16.gmra.mxu0 %v865
        %v898 = vpop.f32.mrf.mxu0
        %v899 = vadd.f32 0.0, %v898
        %v900 = vpop.f32.mrf.mxu0
        %v901 = vadd.f32 0.0, %v900
        %902 = vmatmul.bf16.gmra.mxu0 %v866
        %v903 = vpop.f32.mrf.mxu0
        %v904 = vadd.f32 0.0, %v903
        %v905 = vpop.f32.mrf.mxu0
        %v906 = vadd.f32 0.0, %v905
        %907 = vmatmul.bf16.gmra.mxu0 %v867
        %v908 = vpop.f32.mrf.mxu0
        %v909 = vadd.f32 0.0, %v908
        %v910 = vpop.f32.mrf.mxu0
        %v911 = vadd.f32 0.0, %v910
        %912 = vmatmul.bf16.gmra.mxu0 %v868
        %v913 = vpop.f32.mrf.mxu0
        %v914 = vadd.f32 0.0, %v913
        %v915 = vpop.f32.mrf.mxu0
        %v916 = vadd.f32 0.0, %v915
        %917 = vmatmul.bf16.gmra.mxu0 %v869
        %v918 = vpop.f32.mrf.mxu0
        %v919 = vadd.f32 0.0, %v918
        %v920 = vpop.f32.mrf.mxu0
        %v921 = vadd.f32 0.0, %v920
        %922 = vmatmul.bf16.gmra.mxu0 %v870
        %v923 = vpop.f32.mrf.mxu0
        %v924 = vadd.f32 0.0, %v923
        %v925 = vpop.f32.mrf.mxu0
        %v926 = vadd.f32 0.0, %v925
        %927 = vdwg.mxu0
        %v928 = vadd.f32 %v811, %v889
        %v929 = vadd.f32 %v812, %v891
        %v930 = vadd.f32 %v813, %v894
        %v931 = vadd.f32 %v814, %v896
        %v932 = vadd.f32 %v815, %v899
        %v933 = vadd.f32 %v816, %v901
        %v934 = vadd.f32 %v817, %v904
        %v935 = vadd.f32 %v818, %v906
        %v936 = vadd.f32 %v819, %v909
        %v937 = vadd.f32 %v820, %v911
        %v938 = vadd.f32 %v821, %v914
        %v939 = vadd.f32 %v822, %v916
        %v940 = vadd.f32 %v823, %v919
        %v941 = vadd.f32 %v824, %v921
        %v942 = vadd.f32 %v825, %v924
        %v943 = vadd.f32 %v826, %v926
        %944 = vst.msk [vmem:[#allocation2] sm:$0xff] %vm565, %v928
        %945 = vst.msk [vmem:[#allocation2 + $0x8] sm:$0xff] %vm565, %v929
        %946 = vst.msk [vmem:[#allocation2 + $0x10] sm:$0xff] %vm565, %v930
        %947 = vst.msk [vmem:[#allocation2 + $0x18] sm:$0xff] %vm565, %v931
        %948 = vst.msk [vmem:[#allocation2 + $0x20] sm:$0xff] %vm565, %v932
        %949 = vst.msk [vmem:[#allocation2 + $0x28] sm:$0xff] %vm565, %v933
        %950 = vst.msk [vmem:[#allocation2 + $0x30] sm:$0xff] %vm565, %v934
        %951 = vst.msk [vmem:[#allocation2 + $0x38] sm:$0xff] %vm565, %v935
        %952 = vst.msk [vmem:[#allocation2 + $0x40] sm:$0xff] %vm565, %v936
        %953 = vst.msk [vmem:[#allocation2 + $0x48] sm:$0xff] %vm565, %v937
        %954 = vst.msk [vmem:[#allocation2 + $0x50] sm:$0xff] %vm565, %v938
        %955 = vst.msk [vmem:[#allocation2 + $0x58] sm:$0xff] %vm565, %v939
        %956 = vst.msk [vmem:[#allocation2 + $0x60] sm:$0xff] %vm565, %v940
        %957 = vst.msk [vmem:[#allocation2 + $0x68] sm:$0xff] %vm565, %v941
        %958 = vst.msk [vmem:[#allocation2 + $0x70] sm:$0xff] %vm565, %v942
        %959 = vst.msk [vmem:[#allocation2 + $0x78] sm:$0xff] %vm565, %v943
        %p960 = scmp.eq.s32.totalorder %s27, 3
        // Predicated region
        $region107: #{tpu_custom_call.1} parent=97 // pred_check
          %p961 = pneg %p960
        $region108: #{tpu_custom_call.1} parent=97 // pred_check_branch
          %963 = sbr.rel (%p961) target = $region110
        $region109: #{tpu_custom_call.1} parent=97 // pred_region
          %v964 = vld [vmem:[%s505] sm:$0xff]
          %v965 = vld [vmem:[%s505 + $0x8] sm:$0xff]
          %v966 = vld [vmem:[%s505 + $0x10] sm:$0xff]
          %v967 = vld [vmem:[%s505 + $0x18] sm:$0xff]
          %v968 = vld [vmem:[%s505 + $0x20] sm:$0xff]
          %v969 = vld [vmem:[%s505 + $0x28] sm:$0xff]
          %v970 = vld [vmem:[%s505 + $0x30] sm:$0xff]
          %v971 = vld [vmem:[%s505 + $0x38] sm:$0xff]
          %v972 = vld [vmem:[%s505 + $0x40] sm:$0xff]
          %v973 = vld [vmem:[%s505 + $0x48] sm:$0xff]
          %v974 = vld [vmem:[%s505 + $0x50] sm:$0xff]
          %v975 = vld [vmem:[%s505 + $0x58] sm:$0xff]
          %v976 = vld [vmem:[%s505 + $0x60] sm:$0xff]
          %v977 = vld [vmem:[%s505 + $0x68] sm:$0xff]
          %v978 = vld [vmem:[%s505 + $0x70] sm:$0xff]
          %v979 = vld [vmem:[%s505 + $0x78] sm:$0xff]
          %v980 = vld [vmem:[%s4] sm:$0xff]
          %v981 = vld [vmem:[%s4 + $0x8] sm:$0xff]
          %v982 = vld [vmem:[%s5] sm:$0x1]
          %v983 = vld [vmem:[%s6] sm:$0xff]
          %v984 = vld [vmem:[%s6 + $0x8] sm:$0xff]
          %v985 = vld [vmem:[%s7] sm:$0x1]
          %v987 = vperm.slane %v982, 0
          %v990 = vsel %vm565, %v964, 0
          %v993 = vsel %vm565, %v965, 0
          %v996 = vsel %vm565, %v966, 0
          %v999 = vsel %vm565, %v967, 0
          %v1002 = vsel %vm565, %v968, 0
          %v1005 = vsel %vm565, %v969, 0
          %v1008 = vsel %vm565, %v970, 0
          %v1011 = vsel %vm565, %v971, 0
          %v1014 = vsel %vm565, %v972, 0
          %v1017 = vsel %vm565, %v973, 0
          %v1020 = vsel %vm565, %v974, 0
          %v1023 = vsel %vm565, %v975, 0
          %v1026 = vsel %vm565, %v976, 0
          %v1029 = vsel %vm565, %v977, 0
          %v1032 = vsel %vm565, %v978, 0
          %v1035 = vsel %vm565, %v979, 0
          %1037 = vmatpush.msra.mxu0 0.0
          %1038 = vmatpush.msra.mxu0 0.0
          %1039 = vmatpush.msra.mxu0 0.0
          %1040 = vmatpush.msra.mxu0 0.0
          %1041 = vmatpush.msra.mxu0 0.0
          %1042 = vmatpush.msra.mxu0 0.0
          %1043 = vmatpush.msra.mxu0 0.0
          %1044 = vmatpush.msra.mxu0 0.0
          %1045 = vmatpush.msra.mxu0 0.0
          %1046 = vmatpush.msra.mxu0 0.0
          %1047 = vmatpush.msra.mxu0 0.0
          %1048 = vmatpush.msra.mxu0 0.0
          %1049 = vmatpush.msra.mxu0 0.0
          %1050 = vmatpush.msra.mxu0 0.0
          %1051 = vmatpush.msra.mxu0 %v981
          %1052 = vmatpush.msra.mxu0 %v980
          %1053 = vmatmul.f32.gmra.mxu0 %v990
          %v1054 = vpop.f32.mrf.mxu0
          %v1055 = vadd.f32 %v987, %v1054
          %1056 = vmatmul.f32.gmra.mxu0 %v993
          %v1057 = vpop.f32.mrf.mxu0
          %v1058 = vadd.f32 %v987, %v1057
          %1059 = vmatmul.f32.gmra.mxu0 %v996
          %v1060 = vpop.f32.mrf.mxu0
          %v1061 = vadd.f32 %v987, %v1060
          %1062 = vmatmul.f32.gmra.mxu0 %v999
          %v1063 = vpop.f32.mrf.mxu0
          %v1064 = vadd.f32 %v987, %v1063
          %1065 = vmatmul.f32.gmra.mxu0 %v1002
          %v1066 = vpop.f32.mrf.mxu0
          %v1067 = vadd.f32 %v987, %v1066
          %1068 = vmatmul.f32.gmra.mxu0 %v1005
          %v1069 = vpop.f32.mrf.mxu0
          %v1070 = vadd.f32 %v987, %v1069
          %1071 = vmatmul.f32.gmra.mxu0 %v1008
          %v1072 = vpop.f32.mrf.mxu0
          %v1073 = vadd.f32 %v987, %v1072
          %1074 = vmatmul.f32.gmra.mxu0 %v1011
          %v1075 = vpop.f32.mrf.mxu0
          %v1076 = vadd.f32 %v987, %v1075
          %1077 = vmatmul.f32.gmra.mxu0 %v1014
          %v1078 = vpop.f32.mrf.mxu0
          %v1079 = vadd.f32 %v987, %v1078
          %1080 = vmatmul.f32.gmra.mxu0 %v1017
          %v1081 = vpop.f32.mrf.mxu0
          %v1082 = vadd.f32 %v987, %v1081
          %1083 = vmatmul.f32.gmra.mxu0 %v1020
          %v1084 = vpop.f32.mrf.mxu0
          %v1085 = vadd.f32 %v987, %v1084
          %1086 = vmatmul.f32.gmra.mxu0 %v1023
          %v1087 = vpop.f32.mrf.mxu0
          %v1088 = vadd.f32 %v987, %v1087
          %1089 = vmatmul.f32.gmra.mxu0 %v1026
          %v1090 = vpop.f32.mrf.mxu0
          %v1091 = vadd.f32 %v987, %v1090
          %1092 = vmatmul.f32.gmra.mxu0 %v1029
          %v1093 = vpop.f32.mrf.mxu0
          %v1094 = vadd.f32 %v987, %v1093
          %1095 = vmatmul.f32.gmra.mxu0 %v1032
          %v1096 = vpop.f32.mrf.mxu0
          %v1097 = vadd.f32 %v987, %v1096
          %1098 = vmatmul.f32.gmra.mxu0 %v1035
          %v1099 = vpop.f32.mrf.mxu0
          %v1100 = vadd.f32 %v987, %v1099
          %1101 = vdwg.mxu0
          %v1102 = vmax.f32 %v1055, 0.0
          %v1103 = vmax.f32 %v1058, 0.0
          %v1104 = vmax.f32 %v1061, 0.0
          %v1105 = vmax.f32 %v1064, 0.0
          %v1106 = vmax.f32 %v1067, 0.0
          %v1107 = vmax.f32 %v1070, 0.0
          %v1108 = vmax.f32 %v1073, 0.0
          %v1109 = vmax.f32 %v1076, 0.0
          %v1110 = vmax.f32 %v1079, 0.0
          %v1111 = vmax.f32 %v1082, 0.0
          %v1112 = vmax.f32 %v1085, 0.0
          %v1113 = vmax.f32 %v1088, 0.0
          %v1114 = vmax.f32 %v1091, 0.0
          %v1115 = vmax.f32 %v1094, 0.0
          %v1116 = vmax.f32 %v1097, 0.0
          %v1117 = vmax.f32 %v1100, 0.0
          %v1119 = vperm.slane %v985, 0
          %v1122 = vsel %vm565, %v1102, 0
          %v1125 = vsel %vm565, %v1103, 0
          %v1128 = vsel %vm565, %v1104, 0
          %v1131 = vsel %vm565, %v1105, 0
          %v1134 = vsel %vm565, %v1106, 0
          %v1137 = vsel %vm565, %v1107, 0
          %v1140 = vsel %vm565, %v1108, 0
          %v1143 = vsel %vm565, %v1109, 0
          %v1146 = vsel %vm565, %v1110, 0
          %v1149 = vsel %vm565, %v1111, 0
          %v1152 = vsel %vm565, %v1112, 0
          %v1155 = vsel %vm565, %v1113, 0
          %v1158 = vsel %vm565, %v1114, 0
          %v1161 = vsel %vm565, %v1115, 0
          %v1164 = vsel %vm565, %v1116, 0
          %v1167 = vsel %vm565, %v1117, 0
          %1169 = vmatpush.msra.mxu0 0.0
          %1170 = vmatpush.msra.mxu0 0.0
          %1171 = vmatpush.msra.mxu0 0.0
          %1172 = vmatpush.msra.mxu0 0.0
          %1173 = vmatpush.msra.mxu0 0.0
          %1174 = vmatpush.msra.mxu0 0.0
          %1175 = vmatpush.msra.mxu0 0.0
          %1176 = vmatpush.msra.mxu0 0.0
          %1177 = vmatpush.msra.mxu0 0.0
          %1178 = vmatpush.msra.mxu0 0.0
          %1179 = vmatpush.msra.mxu0 0.0
          %1180 = vmatpush.msra.mxu0 0.0
          %1181 = vmatpush.msra.mxu0 0.0
          %1182 = vmatpush.msra.mxu0 0.0
          %1183 = vmatpush.msra.mxu0 %v984
          %1184 = vmatpush.msra.mxu0 %v983
          %1185 = vmatmul.f32.gmra.mxu0 %v1122
          %v1186 = vpop.f32.mrf.mxu0
          %v1187 = vadd.f32 %v1119, %v1186
          %1188 = vmatmul.f32.gmra.mxu0 %v1125
          %v1189 = vpop.f32.mrf.mxu0
          %v1190 = vadd.f32 %v1119, %v1189
          %1191 = vmatmul.f32.gmra.mxu0 %v1128
          %v1192 = vpop.f32.mrf.mxu0
          %v1193 = vadd.f32 %v1119, %v1192
          %1194 = vmatmul.f32.gmra.mxu0 %v1131
          %v1195 = vpop.f32.mrf.mxu0
          %v1196 = vadd.f32 %v1119, %v1195
          %1197 = vmatmul.f32.gmra.mxu0 %v1134
          %v1198 = vpop.f32.mrf.mxu0
          %v1199 = vadd.f32 %v1119, %v1198
          %1200 = vmatmul.f32.gmra.mxu0 %v1137
          %v1201 = vpop.f32.mrf.mxu0
          %v1202 = vadd.f32 %v1119, %v1201
          %1203 = vmatmul.f32.gmra.mxu0 %v1140
          %v1204 = vpop.f32.mrf.mxu0
          %v1205 = vadd.f32 %v1119, %v1204
          %1206 = vmatmul.f32.gmra.mxu0 %v1143
          %v1207 = vpop.f32.mrf.mxu0
          %v1208 = vadd.f32 %v1119, %v1207
          %1209 = vmatmul.f32.gmra.mxu0 %v1146
          %v1210 = vpop.f32.mrf.mxu0
          %v1211 = vadd.f32 %v1119, %v1210
          %1212 = vmatmul.f32.gmra.mxu0 %v1149
          %v1213 = vpop.f32.mrf.mxu0
          %v1214 = vadd.f32 %v1119, %v1213
          %1215 = vmatmul.f32.gmra.mxu0 %v1152
          %v1216 = vpop.f32.mrf.mxu0
          %v1217 = vadd.f32 %v1119, %v1216
          %1218 = vmatmul.f32.gmra.mxu0 %v1155
          %v1219 = vpop.f32.mrf.mxu0
          %v1220 = vadd.f32 %v1119, %v1219
          %1221 = vmatmul.f32.gmra.mxu0 %v1158
          %v1222 = vpop.f32.mrf.mxu0
          %v1223 = vadd.f32 %v1119, %v1222
          %1224 = vmatmul.f32.gmra.mxu0 %v1161
          %v1225 = vpop.f32.mrf.mxu0
          %v1226 = vadd.f32 %v1119, %v1225
          %1227 = vmatmul.f32.gmra.mxu0 %v1164
          %v1228 = vpop.f32.mrf.mxu0
          %v1229 = vadd.f32 %v1119, %v1228
          %1230 = vmatmul.f32.gmra.mxu0 %v1167
          %v1231 = vpop.f32.mrf.mxu0
          %v1232 = vadd.f32 %v1119, %v1231
          %1233 = vdwg.mxu0
          %v1234 = vld [vmem:[#allocation2] sm:$0xff]
          %v1235 = vld [vmem:[#allocation2 + $0x8] sm:$0xff]
          %v1236 = vld [vmem:[#allocation2 + $0x10] sm:$0xff]
          %v1237 = vld [vmem:[#allocation2 + $0x18] sm:$0xff]
          %v1238 = vld [vmem:[#allocation2 + $0x20] sm:$0xff]
          %v1239 = vld [vmem:[#allocation2 + $0x28] sm:$0xff]
          %v1240 = vld [vmem:[#allocation2 + $0x30] sm:$0xff]
          %v1241 = vld [vmem:[#allocation2 + $0x38] sm:$0xff]
          %v1242 = vld [vmem:[#allocation2 + $0x40] sm:$0xff]
          %v1243 = vld [vmem:[#allocation2 + $0x48] sm:$0xff]
          %v1244 = vld [vmem:[#allocation2 + $0x50] sm:$0xff]
          %v1245 = vld [vmem:[#allocation2 + $0x58] sm:$0xff]
          %v1246 = vld [vmem:[#allocation2 + $0x60] sm:$0xff]
          %v1247 = vld [vmem:[#allocation2 + $0x68] sm:$0xff]
          %v1248 = vld [vmem:[#allocation2 + $0x70] sm:$0xff]
          %v1249 = vld [vmem:[#allocation2 + $0x78] sm:$0xff]
          %v1250 = vld [vmem:[%s511] sm:$0xff]
          %v1251 = vld [vmem:[%s511 + $0x8] sm:$0xff]
          %v1252 = vld [vmem:[%s511 + $0x10] sm:$0xff]
          %v1253 = vld [vmem:[%s511 + $0x18] sm:$0xff]
          %v1254 = vld [vmem:[%s511 + $0x20] sm:$0xff]
          %v1255 = vld [vmem:[%s511 + $0x28] sm:$0xff]
          %v1256 = vld [vmem:[%s511 + $0x30] sm:$0xff]
          %v1257 = vld [vmem:[%s511 + $0x38] sm:$0xff]
          %v1258 = vld [vmem:[%s511 + $0x40] sm:$0xff]
          %v1259 = vld [vmem:[%s511 + $0x48] sm:$0xff]
          %v1260 = vld [vmem:[%s511 + $0x50] sm:$0xff]
          %v1261 = vld [vmem:[%s511 + $0x58] sm:$0xff]
          %v1262 = vld [vmem:[%s511 + $0x60] sm:$0xff]
          %v1263 = vld [vmem:[%s511 + $0x68] sm:$0xff]
          %v1264 = vld [vmem:[%s511 + $0x70] sm:$0xff]
          %v1265 = vld [vmem:[%s511 + $0x78] sm:$0xff]
          %1267 = vset.pattern.permute.xlu0 0
          %1268 = vperm.xlu0 %1267, %v1250
          %v1269 = vpop.permute.xlu0 %1268
          %1272 = vset.pattern.permute.xlu0 0
          %1273 = vperm.xlu0 %1272, %v1251
          %v1274 = vpop.permute.xlu0 %1273
          %1277 = vset.pattern.permute.xlu0 0
          %1278 = vperm.xlu0 %1277, %v1252
          %v1279 = vpop.permute.xlu0 %1278
          %1282 = vset.pattern.permute.xlu0 0
          %1283 = vperm.xlu0 %1282, %v1253
          %v1284 = vpop.permute.xlu0 %1283
          %1287 = vset.pattern.permute.xlu0 0
          %1288 = vperm.xlu0 %1287, %v1254
          %v1289 = vpop.permute.xlu0 %1288
          %1292 = vset.pattern.permute.xlu0 0
          %1293 = vperm.xlu0 %1292, %v1255
          %v1294 = vpop.permute.xlu0 %1293
          %1297 = vset.pattern.permute.xlu0 0
          %1298 = vperm.xlu0 %1297, %v1256
          %v1299 = vpop.permute.xlu0 %1298
          %1302 = vset.pattern.permute.xlu0 0
          %1303 = vperm.xlu0 %1302, %v1257
          %v1304 = vpop.permute.xlu0 %1303
          %1307 = vset.pattern.permute.xlu0 0
          %1308 = vperm.xlu0 %1307, %v1258
          %v1309 = vpop.permute.xlu0 %1308
          %1312 = vset.pattern.permute.xlu0 0
          %1313 = vperm.xlu0 %1312, %v1259
          %v1314 = vpop.permute.xlu0 %1313
          %1317 = vset.pattern.permute.xlu0 0
          %1318 = vperm.xlu0 %1317, %v1260
          %v1319 = vpop.permute.xlu0 %1318
          %1322 = vset.pattern.permute.xlu0 0
          %1323 = vperm.xlu0 %1322, %v1261
          %v1324 = vpop.permute.xlu0 %1323
          %1327 = vset.pattern.permute.xlu0 0
          %1328 = vperm.xlu0 %1327, %v1262
          %v1329 = vpop.permute.xlu0 %1328
          %1332 = vset.pattern.permute.xlu0 0
          %1333 = vperm.xlu0 %1332, %v1263
          %v1334 = vpop.permute.xlu0 %1333
          %1337 = vset.pattern.permute.xlu0 0
          %1338 = vperm.xlu0 %1337, %v1264
          %v1339 = vpop.permute.xlu0 %1338
          %1342 = vset.pattern.permute.xlu0 0
          %1343 = vperm.xlu0 %1342, %v1265
          %v1344 = vpop.permute.xlu0 %1343
          %v1346 = vmul.f32 %v1234, %v1269
          %v1347 = vmul.f32 %v1235, %v1274
          %v1348 = vmul.f32 %v1236, %v1279
          %v1349 = vmul.f32 %v1237, %v1284
          %v1350 = vmul.f32 %v1238, %v1289
          %v1351 = vmul.f32 %v1239, %v1294
          %v1352 = vmul.f32 %v1240, %v1299
          %v1353 = vmul.f32 %v1241, %v1304
          %v1354 = vmul.f32 %v1242, %v1309
          %v1355 = vmul.f32 %v1243, %v1314
          %v1356 = vmul.f32 %v1244, %v1319
          %v1357 = vmul.f32 %v1245, %v1324
          %v1358 = vmul.f32 %v1246, %v1329
          %v1359 = vmul.f32 %v1247, %v1334
          %v1360 = vmul.f32 %v1248, %v1339
          %v1361 = vmul.f32 %v1249, %v1344
          %v1362 = vld [vmem:[%s8] sm:$0xff]
          %v1363 = vld [vmem:[%s8 + $0x8] sm:$0xff]
          %v1364 = vld [vmem:[%s9] sm:$0xff]
          %v1365 = vld [vmem:[%s9 + $0x8] sm:$0xff]
          %v1367 = vsel %vm565, %v1187, 0
          %v1370 = vsel %vm565, %v1190, 0
          %v1373 = vsel %vm565, %v1193, 0
          %v1376 = vsel %vm565, %v1196, 0
          %v1379 = vsel %vm565, %v1199, 0
          %v1382 = vsel %vm565, %v1202, 0
          %v1385 = vsel %vm565, %v1205, 0
          %v1388 = vsel %vm565, %v1208, 0
          %v1391 = vsel %vm565, %v1211, 0
          %v1394 = vsel %vm565, %v1214, 0
          %v1397 = vsel %vm565, %v1217, 0
          %v1400 = vsel %vm565, %v1220, 0
          %v1403 = vsel %vm565, %v1223, 0
          %v1406 = vsel %vm565, %v1226, 0
          %v1409 = vsel %vm565, %v1229, 0
          %v1412 = vsel %vm565, %v1232, 0
          %1414 = vmatpush.msra.mxu0 0.0
          %1415 = vmatpush.msra.mxu0 0.0
          %1416 = vmatpush.msra.mxu0 0.0
          %1417 = vmatpush.msra.mxu0 0.0
          %1418 = vmatpush.msra.mxu0 0.0
          %1419 = vmatpush.msra.mxu0 0.0
          %1420 = vmatpush.msra.mxu0 0.0
          %1421 = vmatpush.msra.mxu0 0.0
          %1422 = vmatpush.msra.mxu0 0.0
          %1423 = vmatpush.msra.mxu0 0.0
          %1424 = vmatpush.msra.mxu0 0.0
          %1425 = vmatpush.msra.mxu0 0.0
          %1426 = vmatpush.msra.mxu0 0.0
          %1427 = vmatpush.msra.mxu0 0.0
          %1428 = vmatpush.msra.mxu0 %v1365
          %1429 = vmatpush.msra.mxu0 %v1364
          %1430 = vmatmul.f32.gmra.mxu0 %v1367
          %v1431 = vpop.f32.mrf.mxu0
          %v1432 = vadd.f32 0.0, %v1431
          %1433 = vmatmul.f32.gmra.mxu0 %v1370
          %v1434 = vpop.f32.mrf.mxu0
          %v1435 = vadd.f32 0.0, %v1434
          %1436 = vmatmul.f32.gmra.mxu0 %v1373
          %v1437 = vpop.f32.mrf.mxu0
          %v1438 = vadd.f32 0.0, %v1437
          %1439 = vmatmul.f32.gmra.mxu0 %v1376
          %v1440 = vpop.f32.mrf.mxu0
          %v1441 = vadd.f32 0.0, %v1440
          %1442 = vmatmul.f32.gmra.mxu0 %v1379
          %v1443 = vpop.f32.mrf.mxu0
          %v1444 = vadd.f32 0.0, %v1443
          %1445 = vmatmul.f32.gmra.mxu0 %v1382
          %v1446 = vpop.f32.mrf.mxu0
          %v1447 = vadd.f32 0.0, %v1446
          %1448 = vmatmul.f32.gmra.mxu0 %v1385
          %v1449 = vpop.f32.mrf.mxu0
          %v1450 = vadd.f32 0.0, %v1449
          %1451 = vmatmul.f32.gmra.mxu0 %v1388
          %v1452 = vpop.f32.mrf.mxu0
          %v1453 = vadd.f32 0.0, %v1452
          %1454 = vmatmul.f32.gmra.mxu0 %v1391
          %v1455 = vpop.f32.mrf.mxu0
          %v1456 = vadd.f32 0.0, %v1455
          %1457 = vmatmul.f32.gmra.mxu0 %v1394
          %v1458 = vpop.f32.mrf.mxu0
          %v1459 = vadd.f32 0.0, %v1458
          %1460 = vmatmul.f32.gmra.mxu0 %v1397
          %v1461 = vpop.f32.mrf.mxu0
          %v1462 = vadd.f32 0.0, %v1461
          %1463 = vmatmul.f32.gmra.mxu0 %v1400
          %v1464 = vpop.f32.mrf.mxu0
          %v1465 = vadd.f32 0.0, %v1464
          %1466 = vmatmul.f32.gmra.mxu0 %v1403
          %v1467 = vpop.f32.mrf.mxu0
          %v1468 = vadd.f32 0.0, %v1467
          %1469 = vmatmul.f32.gmra.mxu0 %v1406
          %v1470 = vpop.f32.mrf.mxu0
          %v1471 = vadd.f32 0.0, %v1470
          %1472 = vmatmul.f32.gmra.mxu0 %v1409
          %v1473 = vpop.f32.mrf.mxu0
          %v1474 = vadd.f32 0.0, %v1473
          %1475 = vmatmul.f32.gmra.mxu0 %v1412
          %v1476 = vpop.f32.mrf.mxu0
          %v1477 = vadd.f32 0.0, %v1476
          %1478 = vdwg.mxu0
          %v1480 = vsel %vm565, %v1346, 0
          %v1483 = vsel %vm565, %v1347, 0
          %v1486 = vsel %vm565, %v1348, 0
          %v1489 = vsel %vm565, %v1349, 0
          %v1492 = vsel %vm565, %v1350, 0
          %v1495 = vsel %vm565, %v1351, 0
          %v1498 = vsel %vm565, %v1352, 0
          %v1501 = vsel %vm565, %v1353, 0
          %v1504 = vsel %vm565, %v1354, 0
          %v1507 = vsel %vm565, %v1355, 0
          %v1510 = vsel %vm565, %v1356, 0
          %v1513 = vsel %vm565, %v1357, 0
          %v1516 = vsel %vm565, %v1358, 0
          %v1519 = vsel %vm565, %v1359, 0
          %v1522 = vsel %vm565, %v1360, 0
          %v1525 = vsel %vm565, %v1361, 0
          %1527 = vmatpush.msra.mxu0 0.0
          %1528 = vmatpush.msra.mxu0 0.0
          %1529 = vmatpush.msra.mxu0 0.0
          %1530 = vmatpush.msra.mxu0 0.0
          %1531 = vmatpush.msra.mxu0 0.0
          %1532 = vmatpush.msra.mxu0 0.0
          %1533 = vmatpush.msra.mxu0 0.0
          %1534 = vmatpush.msra.mxu0 0.0
          %1535 = vmatpush.msra.mxu0 0.0
          %1536 = vmatpush.msra.mxu0 0.0
          %1537 = vmatpush.msra.mxu0 0.0
          %1538 = vmatpush.msra.mxu0 0.0
          %1539 = vmatpush.msra.mxu0 0.0
          %1540 = vmatpush.msra.mxu0 0.0
          %1541 = vmatpush.msra.mxu0 %v1363
          %1542 = vmatpush.msra.mxu0 %v1362
          %1543 = vmatmul.f32.gmra.mxu0 %v1480
          %v1544 = vpop.f32.mrf.mxu0
          %v1545 = vadd.f32 %v1432, %v1544
          %1546 = vmatmul.f32.gmra.mxu0 %v1483
          %v1547 = vpop.f32.mrf.mxu0
          %v1548 = vadd.f32 %v1435, %v1547
          %1549 = vmatmul.f32.gmra.mxu0 %v1486
          %v1550 = vpop.f32.mrf.mxu0
          %v1551 = vadd.f32 %v1438, %v1550
          %1552 = vmatmul.f32.gmra.mxu0 %v1489
          %v1553 = vpop.f32.mrf.mxu0
          %v1554 = vadd.f32 %v1441, %v1553
          %1555 = vmatmul.f32.gmra.mxu0 %v1492
          %v1556 = vpop.f32.mrf.mxu0
          %v1557 = vadd.f32 %v1444, %v1556
          %1558 = vmatmul.f32.gmra.mxu0 %v1495
          %v1559 = vpop.f32.mrf.mxu0
          %v1560 = vadd.f32 %v1447, %v1559
          %1561 = vmatmul.f32.gmra.mxu0 %v1498
          %v1562 = vpop.f32.mrf.mxu0
          %v1563 = vadd.f32 %v1450, %v1562
          %1564 = vmatmul.f32.gmra.mxu0 %v1501
          %v1565 = vpop.f32.mrf.mxu0
          %v1566 = vadd.f32 %v1453, %v1565
          %1567 = vmatmul.f32.gmra.mxu0 %v1504
          %v1568 = vpop.f32.mrf.mxu0
          %v1569 = vadd.f32 %v1456, %v1568
          %1570 = vmatmul.f32.gmra.mxu0 %v1507
          %v1571 = vpop.f32.mrf.mxu0
          %v1572 = vadd.f32 %v1459, %v1571
          %1573 = vmatmul.f32.gmra.mxu0 %v1510
          %v1574 = vpop.f32.mrf.mxu0
          %v1575 = vadd.f32 %v1462, %v1574
          %1576 = vmatmul.f32.gmra.mxu0 %v1513
          %v1577 = vpop.f32.mrf.mxu0
          %v1578 = vadd.f32 %v1465, %v1577
          %1579 = vmatmul.f32.gmra.mxu0 %v1516
          %v1580 = vpop.f32.mrf.mxu0
          %v1581 = vadd.f32 %v1468, %v1580
          %1582 = vmatmul.f32.gmra.mxu0 %v1519
          %v1583 = vpop.f32.mrf.mxu0
          %v1584 = vadd.f32 %v1471, %v1583
          %1585 = vmatmul.f32.gmra.mxu0 %v1522
          %v1586 = vpop.f32.mrf.mxu0
          %v1587 = vadd.f32 %v1474, %v1586
          %1588 = vmatmul.f32.gmra.mxu0 %v1525
          %v1589 = vpop.f32.mrf.mxu0
          %v1590 = vadd.f32 %v1477, %v1589
          %1591 = vdwg.mxu0
          %v1592 = vld [vmem:[%s10] sm:$0x1]
          %v1594 = vperm.slane %v1592, 0
          %v1596 = vadd.f32 %v1545, %v1594
          %v1597 = vadd.f32 %v1548, %v1594
          %v1598 = vadd.f32 %v1551, %v1594
          %v1599 = vadd.f32 %v1554, %v1594
          %v1600 = vadd.f32 %v1557, %v1594
          %v1601 = vadd.f32 %v1560, %v1594
          %v1602 = vadd.f32 %v1563, %v1594
          %v1603 = vadd.f32 %v1566, %v1594
          %v1604 = vadd.f32 %v1569, %v1594
          %v1605 = vadd.f32 %v1572, %v1594
          %v1606 = vadd.f32 %v1575, %v1594
          %v1607 = vadd.f32 %v1578, %v1594
          %v1608 = vadd.f32 %v1581, %v1594
          %v1609 = vadd.f32 %v1584, %v1594
          %v1610 = vadd.f32 %v1587, %v1594
          %v1611 = vadd.f32 %v1590, %v1594
          %vm1612 = vcmask 261120
          %1613 = vst.msk [vmem:[%s517] sm:$0xff] %vm1612, %v1596
          %1614 = vst.msk [vmem:[%s517 + $0x8] sm:$0xff] %vm1612, %v1597
          %1615 = vst.msk [vmem:[%s517 + $0x10] sm:$0xff] %vm1612, %v1598
          %1616 = vst.msk [vmem:[%s517 + $0x18] sm:$0xff] %vm1612, %v1599
          %1617 = vst.msk [vmem:[%s517 + $0x20] sm:$0xff] %vm1612, %v1600
          %1618 = vst.msk [vmem:[%s517 + $0x28] sm:$0xff] %vm1612, %v1601
          %1619 = vst.msk [vmem:[%s517 + $0x30] sm:$0xff] %vm1612, %v1602
          %1620 = vst.msk [vmem:[%s517 + $0x38] sm:$0xff] %vm1612, %v1603
          %1621 = vst.msk [vmem:[%s517 + $0x40] sm:$0xff] %vm1612, %v1604
          %1622 = vst.msk [vmem:[%s517 + $0x48] sm:$0xff] %vm1612, %v1605
          %1623 = vst.msk [vmem:[%s517 + $0x50] sm:$0xff] %vm1612, %v1606
          %1624 = vst.msk [vmem:[%s517 + $0x58] sm:$0xff] %vm1612, %v1607
          %1625 = vst.msk [vmem:[%s517 + $0x60] sm:$0xff] %vm1612, %v1608
          %1626 = vst.msk [vmem:[%s517 + $0x68] sm:$0xff] %vm1612, %v1609
          %1627 = vst.msk [vmem:[%s517 + $0x70] sm:$0xff] %vm1612, %v1610
          %1628 = vst.msk [vmem:[%s517 + $0x78] sm:$0xff] %vm1612, %v1611
        $region110: #{tpu_custom_call.1} parent=97 // pred_fallthru
          _
        %s1629 = smul.u32 16, %s26
        %p1630 = scmp.lt.s32.totalorder %s1629, 63
        %s1631 = scalar_select %p1630, %s1629, 63
        %s1632 = smul.addr %s1631, 8
        %s1633 = scalar_lea.vmem %s11, %s1632
        // Predicated region
        $region111: #{tpu_custom_call.1} parent=97 // pred_check
          %p1634 = pneg %p305
        $region112: #{tpu_custom_call.1} parent=97 // pred_check_branch
          %1636 = sbr.rel (%p1634) target = $region114
        $region113: #{tpu_custom_call.1} parent=97 // pred_region
          %s1637 = smul.u32 16, %s26
        $region114: #{tpu_custom_call.1} parent=97 // pred_fallthru
          _
      $region98: #{tpu_custom_call.1} parent=5 // pred_fallthru
        _
      %p1638 = scmp.le.s32.totalorder 2, %s17
      // Predicated region
      $region115: #{tpu_custom_call.1} parent=5 // pred_check
        %p1639 = pneg %p1638
      $region116: #{tpu_custom_call.1} parent=5 // pred_check_branch
        %1641 = sbr.rel (%p1639) target = $region118
      $region117: #{tpu_custom_call.1} parent=5 // pred_region
        %s1642 = ssub.s32 %s17, 2
        // Predicated region
        $region119: #{tpu_custom_call.1} parent=117 // pred_check
          %p1643 = pneg %p311
        $region120: #{tpu_custom_call.1} parent=117 // pred_check_branch
          %1645 = sbr.rel (%p1643) target = $region122
        $region121: #{tpu_custom_call.1} parent=117 // pred_region
          %s1646 = smul.u32 16, %s28
          %p1647 = scmp.lt.s32.totalorder %s1646, 63
          %s1648 = scalar_select %p1647, %s1646, 63
          %s1649 = smul.addr %s1648, 8
          %s1650 = scalar_lea.vmem %s11, %s1649
        $region122: #{tpu_custom_call.1} parent=117 // pred_fallthru
          _
      $region118: #{tpu_custom_call.1} parent=5 // pred_fallthru
        _
    $region6: #{tpu_custom_call.1} parent=1 // loop_footer
      %s21 = sadd.s32 1, %s17
    $region7: #{tpu_custom_call.1} parent=1 // loop_footer_branch
      %16 = sbr.rel target = $region3
    $region8: #{tpu_custom_call.1} parent=1 // loop_exit
      _

</llo_original>
